<compile_context>
chip_gen: v6e
topology: v6e:2x2x1
jax: 0.10.0
libtpu: 0.0.40
codegen_flags: <defaults>
</compile_context>

<pallas_src>
import functools

import jax
import jax.numpy as jnp
from jax import lax
from jax.experimental import pallas as pl
from jax.experimental.pallas import tpu as pltpu

HIDDEN = 32        # hidden_size (small demo value; module default 768)
BOTTLENECK = 64    # hardcoded in the module
OUTCH = 16         # outch (small demo value; module default 256)
TEMPERATURE = 0.05


# ------------------------- shared numeric helpers (kernel + reference) ---------------

def _layer_norm(x, g, b, eps=1e-5):
    mu = jnp.mean(x, axis=-1, keepdims=True)
    var = jnp.mean((x - mu) ** 2, axis=-1, keepdims=True)
    return (x - mu) * lax.rsqrt(var + eps) * g + b


def _leaky_relu(x, slope=0.2):
    return jnp.where(x > 0, x, slope * x)


# ------------------------------------ kernel -----------------------------------------

def _perm_kernel(h_ref, wint_ref, mrow_ref, mcol_ref,
                 w1_ref, b1_ref, g1_ref, be1_ref,
                 w2_ref, b2_ref, g2_ref, be2_ref,
                 w3_ref, b3_ref, g3_ref, be3_ref,
                 w4_ref, b4_ref,
                 out_ref, prob_ref, *, approx_recip):
    B, TOK, HID = h_ref.shape
    bf = jnp.bfloat16
    inv_t = 1.0 / TEMPERATURE

    def recip(x):
        # EUP approximate reciprocal (separate issue slot) is kept behind a flag;
        # exact divide is the default because the temperature-0.05 exp amplifies
        # ~2^-12-level reciprocal error into percent-level output differences.
        return pl.reciprocal(x, approx=True) if approx_recip else 1.0 / x

    # ---- per-batch token standardization (torch: mean / unbiased std over dim=1) ----
    h = h_ref[...]                                                 # (B, TOK, HID) f32
    mean = jnp.mean(h, axis=1, keepdims=True)
    var = jnp.sum((h - mean) ** 2, axis=1, keepdims=True) / float(TOK - 1)
    x = (h - mean) / (jnp.sqrt(var) + 1e-6)

    # ---- MLP "net": one big-M GEMM chain on the stacked (B*TOK, HID) activations ----
    def dot_bf16(a, w):                                            # bf16 in, f32 acc
        return jnp.dot(a.astype(bf), w, preferred_element_type=jnp.float32)

    x2 = x.reshape(B * TOK, HID)                                   # free when TOK%8==0
    x2 = _leaky_relu(_layer_norm(dot_bf16(x2, w1_ref[...]) + b1_ref[...],
                                 g1_ref[...], be1_ref[...]))
    x2 = _leaky_relu(_layer_norm(dot_bf16(x2, w2_ref[...]) + b2_ref[...],
                                 g2_ref[...], be2_ref[...]))
    x2 = _leaky_relu(_layer_norm(dot_bf16(x2, w3_ref[...]) + b3_ref[...],
                                 g3_ref[...], be3_ref[...]))
    net = dot_bf16(x2, w4_ref[...]) + b4_ref[...]                  # (B*TOK, outch) f32
    outch = net.shape[-1]
    net_b = net.reshape(B, TOK, outch).astype(bf)

    # ---- grid_sample(bilinear, border, align_corners=True) == net @ w_int (batched) -
    sampled = jnp.einsum('bio,boj->bij', net_b, wint_ref[...],
                         preferred_element_type=jnp.float32)       # (B, TOK, TOK)

    # additive mask bias: + 2*mask[j] + mask[i]
    logits = sampled + 2.0 * mrow_ref[...] + mcol_ref[...]

    # global (per batch item) max shift, temperature, exp
    m = jnp.max(jnp.max(logits, axis=2, keepdims=True), axis=1, keepdims=True)
    e = jnp.exp((logits - m) * inv_t)                              # (B, TOK, TOK)

    # ---- fused normalizations: row factors r (softmax denom) and q (L2 norm) --------
    #   prob = (e / (sum_j e + 1e-6)) / (sqrt(sum_j (.)^2 + 1e-8) + 1e-6) = e * (r*q)
    s1 = jnp.sum(e, axis=2, keepdims=True)                         # (B, TOK, 1)
    s2 = jnp.sum(e * e, axis=2, keepdims=True)
    r = recip(s1 + 1e-6)
    q = recip(jnp.sqrt(r * r * s2 + 1e-8) + 1e-6)
    prob = e * (r * q)                                             # permutation_prob
    prob_ref[...] = prob.astype(prob_ref.dtype)

    # ---- permute(): column-normalize over i, then P^T @ h ---------------------------
    c = recip(jnp.sum(prob, axis=1, keepdims=True) + 1e-6)         # (B, 1, TOK)
    p = prob * c
    # Explicit f32 transpose + canonical batched matmul avoids a transposed-LHS
    # dot_general (which may otherwise lower to a hidden bf16 XLU transpose per item).
    p_t = jnp.swapaxes(p, 1, 2)                                    # (B, TOKj, TOKi)
    out = jnp.einsum('bji,bik->bjk', p_t.astype(bf), h.astype(bf),
                     preferred_element_type=jnp.float32)
    out_ref[...] = out.astype(out_ref.dtype)


# ------------------------------ wrapper / host-side prep -----------------------------

def _bilinear_interp_matrix(mask, outch):
    """(N, TOK) additive mask -> (N, outch, TOK) bf16 bilinear sampling matrix.

    Mask-only quantity (cumsum -> grid_y -> bilinear weights for
    grid_sample(bilinear, border, align_corners=True)); computed once on the host side
    so the kernel reduces grid_sample to a single batched matmul.
    """
    valid = (mask > -1.0).astype(jnp.float32)                      # (N, TOK)
    gy = jnp.cumsum(valid, axis=1) / jnp.sum(valid, axis=1, keepdims=True) * 2.0 - 1.0
    iy = jnp.clip((gy + 1.0) * 0.5 * (outch - 1), 0.0, float(outch - 1))
    i0 = jnp.floor(iy)
    frac = iy - i0
    i1 = jnp.minimum(i0 + 1.0, float(outch - 1))
    k = jnp.arange(outch, dtype=jnp.int32)[None, :, None]          # (1, outch, 1)
    w0 = (k == i0.astype(jnp.int32)[:, None, :]).astype(jnp.float32) * (1.0 - frac)[:, None, :]
    w1 = (k == i1.astype(jnp.int32)[:, None, :]).astype(jnp.float32) * frac[:, None, :]
    return (w0 + w1).astype(jnp.bfloat16)                          # (N, outch, TOK)


def _pick_batch_block(N, TOK, HID, outch, bott=BOTTLENECK,
                      vmem_budget_bytes=28 * 1024 * 1024, target_rows=1024):
    """Batch items per grid step.

    Sized by (a) a target on M = B*TOK rows (~512..2048 keeps the MXU fed and
    amortizes the ~0.35us/step overhead), (b) a conservative VMEM working-set budget
    (safe within v7x's 64 MiB physical VMEM; raise on v5e/v6e), and (c) a cap at N//2
    so the grid has >= 2 steps and the "parallel" axis can shard across both v7x
    TensorCores.
    """
    b_rows = max(1, target_rows // TOK)
    per_item = 4 * (2 * TOK * HID                  # double-buffered hidden-in
                    + 2 * TOK * HID                # double-buffered permuted-out
                    + 1 * TOK * TOK                # prob-out (bf16, x2 buffers)
                    + 1 * outch * TOK              # w_int (bf16, x2 buffers)
                    + 4 * TOK * TOK                # logits / e / prob / p temporaries
                    + 3 * TOK * max(HID, bott, outch))   # MLP activations
    b_vmem = max(1, vmem_budget_bytes // max(per_item, 1))
    b_cores = N // 2 if N >= 2 else 1
    b = max(1, min(b_rows, b_vmem, b_cores))
    while N % b:
        b -= 1
    return b


def learnable_permutation_forward(hidden_states, attention_mask, params, *,
                                  b_blk=None,
                                  prob_dtype=jnp.bfloat16,
                                  out_dtype=None,
                                  approx_reciprocal=False,
                                  vmem_budget_bytes=28 * 1024 * 1024,
                                  vmem_limit_bytes=40 * 1024 * 1024):
    """Returns (permuted_hidden (N,TOK,HID), permutation_prob (N,TOK,TOK,1))."""
    hidden_states = hidden_states.astype(jnp.float32)
    N, TOK, HID = hidden_states.shape
    assert TOK > 1, "unbiased std over tokens needs TOK > 1"
    if attention_mask is None:
        attention_mask = jnp.zeros((N, 1, 1, TOK), jnp.float32)
    (w1, b1, g1, be1, w2, b2, g2, be2, w3, b3, g3, be3, w4, b4) = params
    outch = w4.shape[1]
    out_dtype = hidden_states.dtype if out_dtype is None else out_dtype

    mask = attention_mask.reshape(N, TOK).astype(jnp.float32)
    w_int = _bilinear_interp_matrix(mask, outch)                   # (N, outch, TOK) bf16
    mask_row = mask.reshape(N, 1, TOK)                             # mask[j] bias
    mask_col = mask.reshape(N, TOK, 1)                             # mask[i] bias

    bf = jnp.bfloat16
    kparams = (w1.astype(bf), b1, g1, be1,
               w2.astype(bf), b2, g2, be2,
               w3.astype(bf), b3, g3, be3,
               w4.astype(bf), b4)

    if b_blk is None:
        b_blk = _pick_batch_block(N, TOK, HID, outch,
                                  vmem_budget_bytes=vmem_budget_bytes)
    assert N % b_blk == 0
    B = b_blk

    in_specs = [
        pl.BlockSpec((B, TOK, HID), lambda n: (n, 0, 0)),
        pl.BlockSpec((B, outch, TOK), lambda n: (n, 0, 0)),
        pl.BlockSpec((B, 1, TOK), lambda n: (n, 0, 0)),
        pl.BlockSpec((B, TOK, 1), lambda n: (n, 0, 0)),
    ] + [pl.BlockSpec(p.shape, lambda n: (0, 0)) for p in kparams]

    out_shape = (jax.ShapeDtypeStruct((N, TOK, HID), out_dtype),
                 jax.ShapeDtypeStruct((N, TOK, TOK), prob_dtype))
    out_specs = (pl.BlockSpec((B, TOK, HID), lambda n: (n, 0, 0)),
                 pl.BlockSpec((B, TOK, TOK), lambda n: (n, 0, 0)))

    kernel = functools.partial(_perm_kernel, approx_recip=approx_reciprocal)
    permuted, prob = pl.pallas_call(
        kernel,
        out_shape=out_shape,
        grid=(N // B,),
        in_specs=in_specs,
        out_specs=out_specs,
        compiler_params=pltpu.CompilerParams(
            dimension_semantics=("parallel",),
            vmem_limit_bytes=vmem_limit_bytes),
    )(hidden_states, w_int, mask_row, mask_col, *kparams)

    return permuted, prob[..., None]


# ------------------------------ parameters & reference -------------------------------

def init_params(key, hid=HIDDEN, bott=BOTTLENECK, outch=OUTCH):
    """Deterministic synthetic parameters (PyTorch Linear-style uniform init)."""
    ks = jax.random.split(key, 4)

    def linear(k, fan_in, fan_out):
        kw, kb = jax.random.split(k)
        lim = 1.0 / (fan_in ** 0.5)
        w = jax.random.uniform(kw, (fan_in, fan_out), jnp.float32, -lim, lim)
        b = jax.random.uniform(kb, (1, fan_out), jnp.float32, -lim, lim)
        return w, b

    w1, b1 = linear(ks[0], hid, bott)
    w2, b2 = linear(ks[1], bott, bott)
    w3, b3 = linear(ks[2], bott, bott)
    w4, b4 = linear(ks[3], bott, outch)
    ones = jnp.ones((1, bott), jnp.float32)
    zeros = jnp.zeros((1, bott), jnp.float32)
    return (w1, b1, ones, zeros,
            w2, b2, ones, zeros,
            w3, b3, ones, zeros,
            w4, b4)


def reference_forward(hidden_states, attention_mask, params):
    """Pure-JAX reference of the PyTorch forward (eval mode), quantizing matmul inputs
    to bf16 at the same points as the kernel, with the module's exact divides."""
    h = hidden_states.astype(jnp.float32)
    N, TOK, HID = h.shape
    mask = attention_mask.reshape(N, TOK).astype(jnp.float32)
    (w1, b1, g1, be1, w2, b2, g2, be2, w3, b3, g3, be3, w4, b4) = params
    bf = jnp.bfloat16

    mean = h.mean(axis=1, keepdims=True)
    var = jnp.sum((h - mean) ** 2, axis=1, keepdims=True) / float(TOK - 1)
    x = (h - mean) / (jnp.sqrt(var) + 1e-6)

    def dot(a, w):
        return jnp.dot(a.astype(bf), w.astype(bf), preferred_element_type=jnp.float32)

    x = _leaky_relu(_layer_norm(dot(x, w1) + b1, g1, be1))
    x = _leaky_relu(_layer_norm(dot(x, w2) + b2, g2, be2))
    x = _leaky_relu(_layer_norm(dot(x, w3) + b3, g3, be3))
    net = dot(x, w4) + b4                                          # (N, TOK, outch)
    outch = net.shape[-1]

    # grid_sample(bilinear, border, align_corners=True), gather formulation
    valid = (mask > -1.0).astype(jnp.float32)
    gy = jnp.cumsum(valid, axis=1) / jnp.sum(valid, axis=1, keepdims=True) * 2.0 - 1.0
    iy = jnp.clip((gy + 1.0) * 0.5 * (outch - 1), 0.0, float(outch - 1))
    i0 = jnp.floor(iy)
    frac = iy - i0
    i1 = jnp.minimum(i0 + 1.0, float(outch - 1))
    net_q = net.astype(bf).astype(jnp.float32)
    fw0 = (1.0 - frac).astype(bf).astype(jnp.float32)
    fw1 = frac.astype(bf).astype(jnp.float32)
    g0 = jnp.take_along_axis(net_q, i0.astype(jnp.int32)[:, None, :], axis=2)
    g1v = jnp.take_along_axis(net_q, i1.astype(jnp.int32)[:, None, :], axis=2)
    sampled = g0 * fw0[:, None, :] + g1v * fw1[:, None, :]         # (N, TOK, TOK)

    logits = sampled + 2.0 * mask[:, None, :] + mask[:, :, None]
    m = jnp.max(logits.reshape(N, -1), axis=1).reshape(N, 1, 1)
    e = jnp.exp((logits - m) * (1.0 / TEMPERATURE))
    e = e / (e.sum(axis=2, keepdims=True) + 1e-6)
    e = e / (jnp.sqrt((e * e).sum(axis=2, keepdims=True) + 1e-8) + 1e-6)
    prob = e
    p = prob / (prob.sum(axis=1, keepdims=True) + 1e-6)
    permuted = jnp.einsum('nij,nik->njk', p.astype(bf), h.astype(bf),
                          preferred_element_type=jnp.float32)
    return permuted, prob[..., None]


if __name__ == "__main__":
    N, TOK = 2, 8
    key = jax.random.PRNGKey(0)
    k_h, k_p = jax.random.split(key)

    hidden = jax.random.normal(k_h, (N, TOK, HIDDEN), jnp.float32)
    # Additive BERT-style mask: 0 for valid tokens, -10000 for padding.
    lens = jnp.array([TOK, TOK - 2])
    tok_idx = jnp.arange(TOK)
    attention_mask = jnp.where(tok_idx[None, :] < lens[:, None], 0.0, -10000.0)
    attention_mask = attention_mask.reshape(N, 1, 1, TOK).astype(jnp.float32)

    params = init_params(k_p)

    permuted, prob = learnable_permutation_forward(hidden, attention_mask, params)
    jax.block_until_ready((permuted, prob))

    ref_perm, ref_prob = reference_forward(hidden, attention_mask, params)
    assert permuted.shape == (N, TOK, HIDDEN) and prob.shape == (N, TOK, TOK, 1)

    # prob: bf16 output (~0.4% rounding) on top of sub-1% pipeline differences.
    assert jnp.allclose(prob.astype(jnp.float32), ref_prob, rtol=2e-2, atol=2e-3), \
        "permutation_prob mismatch"
    # permuted: the module's temperature=0.05 exp amplifies sub-ulp upstream
    # differences, and the bf16 quantization of P before the final matmul can flip by
    # one bf16 ulp (~0.4%), shifting individual outputs by up to ~ulp(P)*max|h|~1e-2.
    # Structural errors are >10x larger than this tolerance.
    assert jnp.allclose(permuted.astype(jnp.float32), ref_perm, rtol=2e-2, atol=2e-2), \
        "permuted output mismatch"

    print("KERNEL_OK")
</pallas_src>

<mosaic_0001>
module attributes {stable_mosaic.version = 11 : i64} {
  func.func @_perm_kernel(%arg0: i32, %arg1: memref<1x8x32xf32, #tpu.memory_space<vmem>>, %arg2: memref<1x16x8xbf16, #tpu.memory_space<vmem>>, %arg3: memref<1x1x8xf32, #tpu.memory_space<vmem>>, %arg4: memref<1x8x1xf32, #tpu.memory_space<vmem>>, %arg5: memref<32x64xbf16, #tpu.memory_space<vmem>>, %arg6: memref<1x64xf32, #tpu.memory_space<vmem>>, %arg7: memref<1x64xf32, #tpu.memory_space<vmem>>, %arg8: memref<1x64xf32, #tpu.memory_space<vmem>>, %arg9: memref<64x64xbf16, #tpu.memory_space<vmem>>, %arg10: memref<1x64xf32, #tpu.memory_space<vmem>>, %arg11: memref<1x64xf32, #tpu.memory_space<vmem>>, %arg12: memref<1x64xf32, #tpu.memory_space<vmem>>, %arg13: memref<64x64xbf16, #tpu.memory_space<vmem>>, %arg14: memref<1x64xf32, #tpu.memory_space<vmem>>, %arg15: memref<1x64xf32, #tpu.memory_space<vmem>>, %arg16: memref<1x64xf32, #tpu.memory_space<vmem>>, %arg17: memref<64x16xbf16, #tpu.memory_space<vmem>>, %arg18: memref<1x16xf32, #tpu.memory_space<vmem>>, %arg19: memref<1x8x32xf32, #tpu.memory_space<vmem>>, %arg20: memref<1x8x8xbf16, #tpu.memory_space<vmem>>) attributes {dimension_semantics = [#tpu.dimension_semantics<parallel>], iteration_bounds = array<i64: 2>, scalar_prefetch = 0 : i64, scratch_operands = 0 : i64, tpu.core_type = #tpu.core_type<tc>, window_params = [{transform_indices = @transform_0, window_bounds = array<i64: 1, 8, 32>}, {transform_indices = @transform_1, window_bounds = array<i64: 1, 16, 8>}, {transform_indices = @transform_2, window_bounds = array<i64: 1, 1, 8>}, {transform_indices = @transform_3, window_bounds = array<i64: 1, 8, 1>}, {pipeline_mode = #tpu.pipeline_mode<synchronous>, transform_indices = @transform_4, window_bounds = array<i64: 32, 64>}, {pipeline_mode = #tpu.pipeline_mode<synchronous>, transform_indices = @transform_5, window_bounds = array<i64: 1, 64>}, {pipeline_mode = #tpu.pipeline_mode<synchronous>, transform_indices = @transform_6, window_bounds = array<i64: 1, 64>}, {pipeline_mode = #tpu.pipeline_mode<synchronous>, transform_indices = @transform_7, window_bounds = array<i64: 1, 64>}, {pipeline_mode = #tpu.pipeline_mode<synchronous>, transform_indices = @transform_8, window_bounds = array<i64: 64, 64>}, {pipeline_mode = #tpu.pipeline_mode<synchronous>, transform_indices = @transform_9, window_bounds = array<i64: 1, 64>}, {pipeline_mode = #tpu.pipeline_mode<synchronous>, transform_indices = @transform_10, window_bounds = array<i64: 1, 64>}, {pipeline_mode = #tpu.pipeline_mode<synchronous>, transform_indices = @transform_11, window_bounds = array<i64: 1, 64>}, {pipeline_mode = #tpu.pipeline_mode<synchronous>, transform_indices = @transform_12, window_bounds = array<i64: 64, 64>}, {pipeline_mode = #tpu.pipeline_mode<synchronous>, transform_indices = @transform_13, window_bounds = array<i64: 1, 64>}, {pipeline_mode = #tpu.pipeline_mode<synchronous>, transform_indices = @transform_14, window_bounds = array<i64: 1, 64>}, {pipeline_mode = #tpu.pipeline_mode<synchronous>, transform_indices = @transform_15, window_bounds = array<i64: 1, 64>}, {pipeline_mode = #tpu.pipeline_mode<synchronous>, transform_indices = @transform_16, window_bounds = array<i64: 64, 16>}, {pipeline_mode = #tpu.pipeline_mode<synchronous>, transform_indices = @transform_17, window_bounds = array<i64: 1, 16>}, {transform_indices = @transform_18, window_bounds = array<i64: 1, 8, 32>}, {transform_indices = @transform_19, window_bounds = array<i64: 1, 8, 8>}]} {
    %c0 = arith.constant 0 : index
    %c0_0 = arith.constant 0 : index
    %c0_1 = arith.constant 0 : index
    %0 = vector.load %arg1[%c0, %c0_0, %c0_1] : memref<1x8x32xf32, #tpu.memory_space<vmem>>, vector<1x8x32xf32>
    %cst = arith.constant dense<0.000000e+00> : vector<1x32xf32>
    %1 = vector.multi_reduction <add>, %0, %cst [1] : vector<1x8x32xf32> to vector<1x32xf32>
    %2 = vector.shape_cast %1 : vector<1x32xf32> to vector<1x1x32xf32>
    %cst_2 = arith.constant 8.000000e+00 : f32
    %3 = vector.broadcast %cst_2 : f32 to vector<1x1x32xf32>
    %4 = arith.divf %2, %3 : vector<1x1x32xf32>
    %5 = vector.broadcast %4 : vector<1x1x32xf32> to vector<1x8x32xf32>
    %6 = arith.subf %0, %5 : vector<1x8x32xf32>
    %7 = arith.mulf %6, %6 : vector<1x8x32xf32>
    %cst_3 = arith.constant dense<0.000000e+00> : vector<1x32xf32>
    %8 = vector.multi_reduction <add>, %7, %cst_3 [1] : vector<1x8x32xf32> to vector<1x32xf32>
    %9 = vector.shape_cast %8 : vector<1x32xf32> to vector<1x1x32xf32>
    %cst_4 = arith.constant 7.000000e+00 : f32
    %10 = vector.broadcast %cst_4 : f32 to vector<1x1x32xf32>
    %11 = arith.divf %9, %10 : vector<1x1x32xf32>
    %12 = vector.broadcast %4 : vector<1x1x32xf32> to vector<1x8x32xf32>
    %13 = arith.subf %0, %12 : vector<1x8x32xf32>
    %14 = math.sqrt %11 : vector<1x1x32xf32>
    %cst_5 = arith.constant 9.99999997E-7 : f32
    %15 = vector.broadcast %cst_5 : f32 to vector<1x1x32xf32>
    %16 = arith.addf %14, %15 : vector<1x1x32xf32>
    %17 = vector.broadcast %16 : vector<1x1x32xf32> to vector<1x8x32xf32>
    %18 = arith.divf %13, %17 : vector<1x8x32xf32>
    %19 = vector.shape_cast %18 : vector<1x8x32xf32> to vector<8x32xf32>
    %c0_6 = arith.constant 0 : index
    %c0_7 = arith.constant 0 : index
    %20 = vector.load %arg5[%c0_6, %c0_7] : memref<32x64xbf16, #tpu.memory_space<vmem>>, vector<32x64xbf16>
    %21 = arith.truncf %19 : vector<8x32xf32> to vector<8x32xbf16>
    %cst_8 = arith.constant dense<0.000000e+00> : vector<8x64xf32>
    %22 = tpu.matmul %21, %20, %cst_8 {dimension_numbers = #tpu.dot_dimension_numbers<[1], [0], [0], [1], [0, 0, 1, 1], [], []>} : vector<8x32xbf16>, vector<32x64xbf16>, vector<8x64xf32> -> vector<8x64xf32>
    %c0_9 = arith.constant 0 : index
    %c0_10 = arith.constant 0 : index
    %23 = vector.load %arg6[%c0_9, %c0_10] : memref<1x64xf32, #tpu.memory_space<vmem>>, vector<1x64xf32>
    %24 = vector.broadcast %23 : vector<1x64xf32> to vector<8x64xf32>
    %25 = arith.addf %22, %24 : vector<8x64xf32>
    %c0_11 = arith.constant 0 : index
    %c0_12 = arith.constant 0 : index
    %26 = vector.load %arg7[%c0_11, %c0_12] : memref<1x64xf32, #tpu.memory_space<vmem>>, vector<1x64xf32>
    %c0_13 = arith.constant 0 : index
    %c0_14 = arith.constant 0 : index
    %27 = vector.load %arg8[%c0_13, %c0_14] : memref<1x64xf32, #tpu.memory_space<vmem>>, vector<1x64xf32>
    %cst_15 = arith.constant dense<0.000000e+00> : vector<8xf32>
    %28 = vector.multi_reduction <add>, %25, %cst_15 [1] : vector<8x64xf32> to vector<8xf32>
    %29 = vector.shape_cast %28 : vector<8xf32> to vector<8x1xf32>
    %cst_16 = arith.constant 6.400000e+01 : f32
    %30 = vector.broadcast %cst_16 : f32 to vector<8x1xf32>
    %31 = arith.divf %29, %30 : vector<8x1xf32>
    %32 = vector.broadcast %31 : vector<8x1xf32> to vector<8x64xf32>
    %33 = arith.subf %25, %32 : vector<8x64xf32>
    %34 = arith.mulf %33, %33 : vector<8x64xf32>
    %cst_17 = arith.constant dense<0.000000e+00> : vector<8xf32>
    %35 = vector.multi_reduction <add>, %34, %cst_17 [1] : vector<8x64xf32> to vector<8xf32>
    %36 = vector.shape_cast %35 : vector<8xf32> to vector<8x1xf32>
    %cst_18 = arith.constant 6.400000e+01 : f32
    %37 = vector.broadcast %cst_18 : f32 to vector<8x1xf32>
    %38 = arith.divf %36, %37 : vector<8x1xf32>
    %39 = vector.broadcast %31 : vector<8x1xf32> to vector<8x64xf32>
    %40 = arith.subf %25, %39 : vector<8x64xf32>
    %cst_19 = arith.constant 9.99999974E-6 : f32
    %41 = vector.broadcast %cst_19 : f32 to vector<8x1xf32>
    %42 = arith.addf %38, %41 : vector<8x1xf32>
    %43 = math.rsqrt %42 : vector<8x1xf32>
    %44 = vector.broadcast %43 : vector<8x1xf32> to vector<8x64xf32>
    %45 = arith.mulf %40, %44 : vector<8x64xf32>
    %46 = vector.broadcast %26 : vector<1x64xf32> to vector<8x64xf32>
    %47 = arith.mulf %45, %46 : vector<8x64xf32>
    %48 = vector.broadcast %27 : vector<1x64xf32> to vector<8x64xf32>
    %49 = arith.addf %47, %48 : vector<8x64xf32>
    %cst_20 = arith.constant 0.000000e+00 : f32
    %50 = vector.broadcast %cst_20 : f32 to vector<8x64xf32>
    %51 = arith.cmpf ogt, %49, %50 : vector<8x64xf32>
    %cst_21 = arith.constant 2.000000e-01 : f32
    %52 = vector.broadcast %cst_21 : f32 to vector<8x64xf32>
    %53 = arith.mulf %52, %49 : vector<8x64xf32>
    %54 = arith.select %51, %49, %53 : vector<8x64xi1>, vector<8x64xf32>
    %c0_22 = arith.constant 0 : index
    %c0_23 = arith.constant 0 : index
    %55 = vector.load %arg9[%c0_22, %c0_23] : memref<64x64xbf16, #tpu.memory_space<vmem>>, vector<64x64xbf16>
    %56 = arith.truncf %54 : vector<8x64xf32> to vector<8x64xbf16>
    %cst_24 = arith.constant dense<0.000000e+00> : vector<8x64xf32>
    %57 = tpu.matmul %56, %55, %cst_24 {dimension_numbers = #tpu.dot_dimension_numbers<[1], [0], [0], [1], [0, 0, 1, 1], [], []>} : vector<8x64xbf16>, vector<64x64xbf16>, vector<8x64xf32> -> vector<8x64xf32>
    %c0_25 = arith.constant 0 : index
    %c0_26 = arith.constant 0 : index
    %58 = vector.load %arg10[%c0_25, %c0_26] : memref<1x64xf32, #tpu.memory_space<vmem>>, vector<1x64xf32>
    %59 = vector.broadcast %58 : vector<1x64xf32> to vector<8x64xf32>
    %60 = arith.addf %57, %59 : vector<8x64xf32>
    %c0_27 = arith.constant 0 : index
    %c0_28 = arith.constant 0 : index
    %61 = vector.load %arg11[%c0_27, %c0_28] : memref<1x64xf32, #tpu.memory_space<vmem>>, vector<1x64xf32>
    %c0_29 = arith.constant 0 : index
    %c0_30 = arith.constant 0 : index
    %62 = vector.load %arg12[%c0_29, %c0_30] : memref<1x64xf32, #tpu.memory_space<vmem>>, vector<1x64xf32>
    %cst_31 = arith.constant dense<0.000000e+00> : vector<8xf32>
    %63 = vector.multi_reduction <add>, %60, %cst_31 [1] : vector<8x64xf32> to vector<8xf32>
    %64 = vector.shape_cast %63 : vector<8xf32> to vector<8x1xf32>
    %cst_32 = arith.constant 6.400000e+01 : f32
    %65 = vector.broadcast %cst_32 : f32 to vector<8x1xf32>
    %66 = arith.divf %64, %65 : vector<8x1xf32>
    %67 = vector.broadcast %66 : vector<8x1xf32> to vector<8x64xf32>
    %68 = arith.subf %60, %67 : vector<8x64xf32>
    %69 = arith.mulf %68, %68 : vector<8x64xf32>
    %cst_33 = arith.constant dense<0.000000e+00> : vector<8xf32>
    %70 = vector.multi_reduction <add>, %69, %cst_33 [1] : vector<8x64xf32> to vector<8xf32>
    %71 = vector.shape_cast %70 : vector<8xf32> to vector<8x1xf32>
    %cst_34 = arith.constant 6.400000e+01 : f32
    %72 = vector.broadcast %cst_34 : f32 to vector<8x1xf32>
    %73 = arith.divf %71, %72 : vector<8x1xf32>
    %74 = vector.broadcast %66 : vector<8x1xf32> to vector<8x64xf32>
    %75 = arith.subf %60, %74 : vector<8x64xf32>
    %cst_35 = arith.constant 9.99999974E-6 : f32
    %76 = vector.broadcast %cst_35 : f32 to vector<8x1xf32>
    %77 = arith.addf %73, %76 : vector<8x1xf32>
    %78 = math.rsqrt %77 : vector<8x1xf32>
    %79 = vector.broadcast %78 : vector<8x1xf32> to vector<8x64xf32>
    %80 = arith.mulf %75, %79 : vector<8x64xf32>
    %81 = vector.broadcast %61 : vector<1x64xf32> to vector<8x64xf32>
    %82 = arith.mulf %80, %81 : vector<8x64xf32>
    %83 = vector.broadcast %62 : vector<1x64xf32> to vector<8x64xf32>
    %84 = arith.addf %82, %83 : vector<8x64xf32>
    %cst_36 = arith.constant 0.000000e+00 : f32
    %85 = vector.broadcast %cst_36 : f32 to vector<8x64xf32>
    %86 = arith.cmpf ogt, %84, %85 : vector<8x64xf32>
    %cst_37 = arith.constant 2.000000e-01 : f32
    %87 = vector.broadcast %cst_37 : f32 to vector<8x64xf32>
    %88 = arith.mulf %87, %84 : vector<8x64xf32>
    %89 = arith.select %86, %84, %88 : vector<8x64xi1>, vector<8x64xf32>
    %c0_38 = arith.constant 0 : index
    %c0_39 = arith.constant 0 : index
    %90 = vector.load %arg13[%c0_38, %c0_39] : memref<64x64xbf16, #tpu.memory_space<vmem>>, vector<64x64xbf16>
    %91 = arith.truncf %89 : vector<8x64xf32> to vector<8x64xbf16>
    %cst_40 = arith.constant dense<0.000000e+00> : vector<8x64xf32>
    %92 = tpu.matmul %91, %90, %cst_40 {dimension_numbers = #tpu.dot_dimension_numbers<[1], [0], [0], [1], [0, 0, 1, 1], [], []>} : vector<8x64xbf16>, vector<64x64xbf16>, vector<8x64xf32> -> vector<8x64xf32>
    %c0_41 = arith.constant 0 : index
    %c0_42 = arith.constant 0 : index
    %93 = vector.load %arg14[%c0_41, %c0_42] : memref<1x64xf32, #tpu.memory_space<vmem>>, vector<1x64xf32>
    %94 = vector.broadcast %93 : vector<1x64xf32> to vector<8x64xf32>
    %95 = arith.addf %92, %94 : vector<8x64xf32>
    %c0_43 = arith.constant 0 : index
    %c0_44 = arith.constant 0 : index
    %96 = vector.load %arg15[%c0_43, %c0_44] : memref<1x64xf32, #tpu.memory_space<vmem>>, vector<1x64xf32>
    %c0_45 = arith.constant 0 : index
    %c0_46 = arith.constant 0 : index
    %97 = vector.load %arg16[%c0_45, %c0_46] : memref<1x64xf32, #tpu.memory_space<vmem>>, vector<1x64xf32>
    %cst_47 = arith.constant dense<0.000000e+00> : vector<8xf32>
    %98 = vector.multi_reduction <add>, %95, %cst_47 [1] : vector<8x64xf32> to vector<8xf32>
    %99 = vector.shape_cast %98 : vector<8xf32> to vector<8x1xf32>
    %cst_48 = arith.constant 6.400000e+01 : f32
    %100 = vector.broadcast %cst_48 : f32 to vector<8x1xf32>
    %101 = arith.divf %99, %100 : vector<8x1xf32>
    %102 = vector.broadcast %101 : vector<8x1xf32> to vector<8x64xf32>
    %103 = arith.subf %95, %102 : vector<8x64xf32>
    %104 = arith.mulf %103, %103 : vector<8x64xf32>
    %cst_49 = arith.constant dense<0.000000e+00> : vector<8xf32>
    %105 = vector.multi_reduction <add>, %104, %cst_49 [1] : vector<8x64xf32> to vector<8xf32>
    %106 = vector.shape_cast %105 : vector<8xf32> to vector<8x1xf32>
    %cst_50 = arith.constant 6.400000e+01 : f32
    %107 = vector.broadcast %cst_50 : f32 to vector<8x1xf32>
    %108 = arith.divf %106, %107 : vector<8x1xf32>
    %109 = vector.broadcast %101 : vector<8x1xf32> to vector<8x64xf32>
    %110 = arith.subf %95, %109 : vector<8x64xf32>
    %cst_51 = arith.constant 9.99999974E-6 : f32
    %111 = vector.broadcast %cst_51 : f32 to vector<8x1xf32>
    %112 = arith.addf %108, %111 : vector<8x1xf32>
    %113 = math.rsqrt %112 : vector<8x1xf32>
    %114 = vector.broadcast %113 : vector<8x1xf32> to vector<8x64xf32>
    %115 = arith.mulf %110, %114 : vector<8x64xf32>
    %116 = vector.broadcast %96 : vector<1x64xf32> to vector<8x64xf32>
    %117 = arith.mulf %115, %116 : vector<8x64xf32>
    %118 = vector.broadcast %97 : vector<1x64xf32> to vector<8x64xf32>
    %119 = arith.addf %117, %118 : vector<8x64xf32>
    %cst_52 = arith.constant 0.000000e+00 : f32
    %120 = vector.broadcast %cst_52 : f32 to vector<8x64xf32>
    %121 = arith.cmpf ogt, %119, %120 : vector<8x64xf32>
    %cst_53 = arith.constant 2.000000e-01 : f32
    %122 = vector.broadcast %cst_53 : f32 to vector<8x64xf32>
    %123 = arith.mulf %122, %119 : vector<8x64xf32>
    %124 = arith.select %121, %119, %123 : vector<8x64xi1>, vector<8x64xf32>
    %c0_54 = arith.constant 0 : index
    %c0_55 = arith.constant 0 : index
    %125 = vector.load %arg17[%c0_54, %c0_55] : memref<64x16xbf16, #tpu.memory_space<vmem>>, vector<64x16xbf16>
    %126 = arith.truncf %124 : vector<8x64xf32> to vector<8x64xbf16>
    %cst_56 = arith.constant dense<0.000000e+00> : vector<8x16xf32>
    %127 = tpu.matmul %126, %125, %cst_56 {dimension_numbers = #tpu.dot_dimension_numbers<[1], [0], [0], [1], [0, 0, 1, 1], [], []>} : vector<8x64xbf16>, vector<64x16xbf16>, vector<8x16xf32> -> vector<8x16xf32>
    %c0_57 = arith.constant 0 : index
    %c0_58 = arith.constant 0 : index
    %128 = vector.load %arg18[%c0_57, %c0_58] : memref<1x16xf32, #tpu.memory_space<vmem>>, vector<1x16xf32>
    %129 = vector.broadcast %128 : vector<1x16xf32> to vector<8x16xf32>
    %130 = arith.addf %127, %129 : vector<8x16xf32>
    %131 = vector.shape_cast %130 : vector<8x16xf32> to vector<1x8x16xf32>
    %132 = arith.truncf %131 : vector<1x8x16xf32> to vector<1x8x16xbf16>
    %c0_59 = arith.constant 0 : index
    %c0_60 = arith.constant 0 : index
    %c0_61 = arith.constant 0 : index
    %133 = vector.load %arg2[%c0_59, %c0_60, %c0_61] : memref<1x16x8xbf16, #tpu.memory_space<vmem>>, vector<1x16x8xbf16>
    "tpu.trace_start"() <{level = 10 : i32, message = "bio,boj->bij"}> : () -> ()
    %cst_62 = arith.constant dense<0.000000e+00> : vector<1x8x8xf32>
    %134 = tpu.matmul %132, %133, %cst_62 {dimension_numbers = #tpu.dot_dimension_numbers<[2], [1], [1], [2], [0, 0, 0, 1, 1, 2], [0], [0]>} : vector<1x8x16xbf16>, vector<1x16x8xbf16>, vector<1x8x8xf32> -> vector<1x8x8xf32>
    "tpu.trace_stop"() : () -> ()
    %c0_63 = arith.constant 0 : index
    %c0_64 = arith.constant 0 : index
    %c0_65 = arith.constant 0 : index
    %135 = vector.load %arg3[%c0_63, %c0_64, %c0_65] : memref<1x1x8xf32, #tpu.memory_space<vmem>>, vector<1x1x8xf32>
    %cst_66 = arith.constant 2.000000e+00 : f32
    %136 = vector.broadcast %cst_66 : f32 to vector<1x1x8xf32>
    %137 = arith.mulf %136, %135 : vector<1x1x8xf32>
    %138 = vector.broadcast %137 : vector<1x1x8xf32> to vector<1x8x8xf32>
    %139 = arith.addf %134, %138 : vector<1x8x8xf32>
    %c0_67 = arith.constant 0 : index
    %c0_68 = arith.constant 0 : index
    %c0_69 = arith.constant 0 : index
    %140 = vector.load %arg4[%c0_67, %c0_68, %c0_69] : memref<1x8x1xf32, #tpu.memory_space<vmem>>, vector<1x8x1xf32>
    %141 = vector.broadcast %140 : vector<1x8x1xf32> to vector<1x8x8xf32>
    %142 = arith.addf %139, %141 : vector<1x8x8xf32>
    %cst_70 = arith.constant dense<0xFF800000> : vector<1x8xf32>
    %143 = vector.multi_reduction <maximumf>, %142, %cst_70 [2] : vector<1x8x8xf32> to vector<1x8xf32>
    %144 = vector.shape_cast %143 : vector<1x8xf32> to vector<1x8x1xf32>
    %cst_71 = arith.constant dense<0xFF800000> : vector<1x1xf32>
    %145 = vector.multi_reduction <maximumf>, %144, %cst_71 [1] : vector<1x8x1xf32> to vector<1x1xf32>
    %146 = vector.shape_cast %145 : vector<1x1xf32> to vector<1x1x1xf32>
    %147 = vector.broadcast %146 : vector<1x1x1xf32> to vector<1x8x8xf32>
    %148 = arith.subf %142, %147 : vector<1x8x8xf32>
    %cst_72 = arith.constant 2.000000e+01 : f32
    %149 = vector.broadcast %cst_72 : f32 to vector<1x8x8xf32>
    %150 = arith.mulf %148, %149 : vector<1x8x8xf32>
    %151 = math.exp %150 : vector<1x8x8xf32>
    %cst_73 = arith.constant dense<0.000000e+00> : vector<1x8xf32>
    %152 = vector.multi_reduction <add>, %151, %cst_73 [2] : vector<1x8x8xf32> to vector<1x8xf32>
    %153 = vector.shape_cast %152 : vector<1x8xf32> to vector<1x8x1xf32>
    %154 = arith.mulf %151, %151 : vector<1x8x8xf32>
    %cst_74 = arith.constant dense<0.000000e+00> : vector<1x8xf32>
    %155 = vector.multi_reduction <add>, %154, %cst_74 [2] : vector<1x8x8xf32> to vector<1x8xf32>
    %156 = vector.shape_cast %155 : vector<1x8xf32> to vector<1x8x1xf32>
    %cst_75 = arith.constant 9.99999997E-7 : f32
    %157 = vector.broadcast %cst_75 : f32 to vector<1x8x1xf32>
    %158 = arith.addf %153, %157 : vector<1x8x1xf32>
    %cst_76 = arith.constant 1.000000e+00 : f32
    %159 = vector.broadcast %cst_76 : f32 to vector<1x8x1xf32>
    %160 = arith.divf %159, %158 : vector<1x8x1xf32>
    %161 = arith.mulf %160, %160 : vector<1x8x1xf32>
    %162 = arith.mulf %161, %156 : vector<1x8x1xf32>
    %cst_77 = arith.constant 9.99999993E-9 : f32
    %163 = vector.broadcast %cst_77 : f32 to vector<1x8x1xf32>
    %164 = arith.addf %162, %163 : vector<1x8x1xf32>
    %165 = math.sqrt %164 : vector<1x8x1xf32>
    %cst_78 = arith.constant 9.99999997E-7 : f32
    %166 = vector.broadcast %cst_78 : f32 to vector<1x8x1xf32>
    %167 = arith.addf %165, %166 : vector<1x8x1xf32>
    %cst_79 = arith.constant 1.000000e+00 : f32
    %168 = vector.broadcast %cst_79 : f32 to vector<1x8x1xf32>
    %169 = arith.divf %168, %167 : vector<1x8x1xf32>
    %170 = arith.mulf %160, %169 : vector<1x8x1xf32>
    %171 = vector.broadcast %170 : vector<1x8x1xf32> to vector<1x8x8xf32>
    %172 = arith.mulf %151, %171 : vector<1x8x8xf32>
    %173 = arith.truncf %172 : vector<1x8x8xf32> to vector<1x8x8xbf16>
    %c0_80 = arith.constant 0 : index
    %c0_81 = arith.constant 0 : index
    %c0_82 = arith.constant 0 : index
    %174 = vector.load %arg20[%c0_80, %c0_81, %c0_82] : memref<1x8x8xbf16, #tpu.memory_space<vmem>>, vector<1x8x8xbf16>
    tpu.vector_store %arg20[%c0_80, %c0_81, %c0_82], %173 {strides = array<i32>} : memref<1x8x8xbf16, #tpu.memory_space<vmem>>, vector<1x8x8xbf16>,
    %cst_83 = arith.constant dense<0.000000e+00> : vector<1x8xf32>
    %175 = vector.multi_reduction <add>, %172, %cst_83 [1] : vector<1x8x8xf32> to vector<1x8xf32>
    %176 = vector.shape_cast %175 : vector<1x8xf32> to vector<1x1x8xf32>
    %cst_84 = arith.constant 9.99999997E-7 : f32
    %177 = vector.broadcast %cst_84 : f32 to vector<1x1x8xf32>
    %178 = arith.addf %176, %177 : vector<1x1x8xf32>
    %cst_85 = arith.constant 1.000000e+00 : f32
    %179 = vector.broadcast %cst_85 : f32 to vector<1x1x8xf32>
    %180 = arith.divf %179, %178 : vector<1x1x8xf32>
    %181 = vector.broadcast %180 : vector<1x1x8xf32> to vector<1x8x8xf32>
    %182 = arith.mulf %172, %181 : vector<1x8x8xf32>
    %183 = tpu.transpose %182, [0, 2, 1] : vector<1x8x8xf32> -> vector<1x8x8xf32>
    %184 = arith.truncf %183 : vector<1x8x8xf32> to vector<1x8x8xbf16>
    %185 = arith.truncf %0 : vector<1x8x32xf32> to vector<1x8x32xbf16>
    "tpu.trace_start"() <{level = 10 : i32, message = "bji,bik->bjk"}> : () -> ()
    %cst_86 = arith.constant dense<0.000000e+00> : vector<1x8x32xf32>
    %186 = tpu.matmul %184, %185, %cst_86 {dimension_numbers = #tpu.dot_dimension_numbers<[2], [1], [1], [2], [0, 0, 0, 1, 1, 2], [0], [0]>} : vector<1x8x8xbf16>, vector<1x8x32xbf16>, vector<1x8x32xf32> -> vector<1x8x32xf32>
    "tpu.trace_stop"() : () -> ()
    %c0_87 = arith.constant 0 : index
    %c0_88 = arith.constant 0 : index
    %c0_89 = arith.constant 0 : index
    %187 = vector.load %arg19[%c0_87, %c0_88, %c0_89] : memref<1x8x32xf32, #tpu.memory_space<vmem>>, vector<1x8x32xf32>
    tpu.vector_store %arg19[%c0_87, %c0_88, %c0_89], %186 {strides = array<i32>} : memref<1x8x32xf32, #tpu.memory_space<vmem>>, vector<1x8x32xf32>,
    return
  }
  func.func @transform_0(%arg0: i32) -> (i32, i32, i32) {
    %c0_i32 = arith.constant 0 : i32
    %c0_i32_0 = arith.constant 0 : i32
    %c0_i32_1 = arith.constant 0 : i32
    return %arg0, %c0_i32, %c0_i32_0 : i32, i32, i32
  }
  func.func @transform_1(%arg0: i32) -> (i32, i32, i32) {
    %c0_i32 = arith.constant 0 : i32
    %c0_i32_0 = arith.constant 0 : i32
    %c0_i32_1 = arith.constant 0 : i32
    return %arg0, %c0_i32, %c0_i32_0 : i32, i32, i32
  }
  func.func @transform_2(%arg0: i32) -> (i32, i32, i32) {
    %c0_i32 = arith.constant 0 : i32
    %c0_i32_0 = arith.constant 0 : i32
    %c0_i32_1 = arith.constant 0 : i32
    return %arg0, %c0_i32, %c0_i32_0 : i32, i32, i32
  }
  func.func @transform_3(%arg0: i32) -> (i32, i32, i32) {
    %c0_i32 = arith.constant 0 : i32
    %c0_i32_0 = arith.constant 0 : i32
    %c0_i32_1 = arith.constant 0 : i32
    return %arg0, %c0_i32, %c0_i32_0 : i32, i32, i32
  }
  func.func @transform_4(%arg0: i32) -> (i32, i32) {
    %c0_i32 = arith.constant 0 : i32
    %c0_i32_0 = arith.constant 0 : i32
    %c0_i32_1 = arith.constant 0 : i32
    return %c0_i32, %c0_i32_0 : i32, i32
  }
  func.func @transform_5(%arg0: i32) -> (i32, i32) {
    %c0_i32 = arith.constant 0 : i32
    %c0_i32_0 = arith.constant 0 : i32
    %c0_i32_1 = arith.constant 0 : i32
    return %c0_i32, %c0_i32_0 : i32, i32
  }
  func.func @transform_6(%arg0: i32) -> (i32, i32) {
    %c0_i32 = arith.constant 0 : i32
    %c0_i32_0 = arith.constant 0 : i32
    %c0_i32_1 = arith.constant 0 : i32
    return %c0_i32, %c0_i32_0 : i32, i32
  }
  func.func @transform_7(%arg0: i32) -> (i32, i32) {
    %c0_i32 = arith.constant 0 : i32
    %c0_i32_0 = arith.constant 0 : i32
    %c0_i32_1 = arith.constant 0 : i32
    return %c0_i32, %c0_i32_0 : i32, i32
  }
  func.func @transform_8(%arg0: i32) -> (i32, i32) {
    %c0_i32 = arith.constant 0 : i32
    %c0_i32_0 = arith.constant 0 : i32
    %c0_i32_1 = arith.constant 0 : i32
    return %c0_i32, %c0_i32_0 : i32, i32
  }
  func.func @transform_9(%arg0: i32) -> (i32, i32) {
    %c0_i32 = arith.constant 0 : i32
    %c0_i32_0 = arith.constant 0 : i32
    %c0_i32_1 = arith.constant 0 : i32
    return %c0_i32, %c0_i32_0 : i32, i32
  }
  func.func @transform_10(%arg0: i32) -> (i32, i32) {
    %c0_i32 = arith.constant 0 : i32
    %c0_i32_0 = arith.constant 0 : i32
    %c0_i32_1 = arith.constant 0 : i32
    return %c0_i32, %c0_i32_0 : i32, i32
  }
  func.func @transform_11(%arg0: i32) -> (i32, i32) {
    %c0_i32 = arith.constant 0 : i32
    %c0_i32_0 = arith.constant 0 : i32
    %c0_i32_1 = arith.constant 0 : i32
    return %c0_i32, %c0_i32_0 : i32, i32
  }
  func.func @transform_12(%arg0: i32) -> (i32, i32) {
    %c0_i32 = arith.constant 0 : i32
    %c0_i32_0 = arith.constant 0 : i32
    %c0_i32_1 = arith.constant 0 : i32
    return %c0_i32, %c0_i32_0 : i32, i32
  }
  func.func @transform_13(%arg0: i32) -> (i32, i32) {
    %c0_i32 = arith.constant 0 : i32
    %c0_i32_0 = arith.constant 0 : i32
    %c0_i32_1 = arith.constant 0 : i32
    return %c0_i32, %c0_i32_0 : i32, i32
  }
  func.func @transform_14(%arg0: i32) -> (i32, i32) {
    %c0_i32 = arith.constant 0 : i32
    %c0_i32_0 = arith.constant 0 : i32
    %c0_i32_1 = arith.constant 0 : i32
    return %c0_i32, %c0_i32_0 : i32, i32
  }
  func.func @transform_15(%arg0: i32) -> (i32, i32) {
    %c0_i32 = arith.constant 0 : i32
    %c0_i32_0 = arith.constant 0 : i32
    %c0_i32_1 = arith.constant 0 : i32
    return %c0_i32, %c0_i32_0 : i32, i32
  }
  func.func @transform_16(%arg0: i32) -> (i32, i32) {
    %c0_i32 = arith.constant 0 : i32
    %c0_i32_0 = arith.constant 0 : i32
    %c0_i32_1 = arith.constant 0 : i32
    return %c0_i32, %c0_i32_0 : i32, i32
  }
  func.func @transform_17(%arg0: i32) -> (i32, i32) {
    %c0_i32 = arith.constant 0 : i32
    %c0_i32_0 = arith.constant 0 : i32
    %c0_i32_1 = arith.constant 0 : i32
    return %c0_i32, %c0_i32_0 : i32, i32
  }
  func.func @transform_18(%arg0: i32) -> (i32, i32, i32) {
    %c0_i32 = arith.constant 0 : i32
    %c0_i32_0 = arith.constant 0 : i32
    %c0_i32_1 = arith.constant 0 : i32
    return %arg0, %c0_i32, %c0_i32_0 : i32, i32, i32
  }
  func.func @transform_19(%arg0: i32) -> (i32, i32, i32) {
    %c0_i32 = arith.constant 0 : i32
    %c0_i32_0 = arith.constant 0 : i32
    %c0_i32_1 = arith.constant 0 : i32
    return %arg0, %c0_i32, %c0_i32_0 : i32, i32, i32
  }
}

</mosaic_0001>

<llo_original>
// kernel: tpu_custom_call.1
$region0: #{tpu_custom_call.1}
  #allocation0 [shape = 'u32[]', space=smem, size = 0x4, offset = 0x4, fixed_abs, tag = 'smem constant byte address 0x4 - core index']
  #allocation1 [shape = 'u32[144,128]{1,0:T(1,128)}', space=vmem, size = 0x12000, scoped, tag = 'internal scratch']
  %s0 = inlined_call_operand.vmem [shape: f32[2,8,32], index: 0, kind: input, shape index: {}]
  %s1 = inlined_call_operand.vmem [shape: bf16[2,16,8], index: 1, kind: input, shape index: {}]
  %s2 = inlined_call_operand.hbm [shape: f32[2,1,8], index: 2, kind: input, shape index: {}]
  %s3 = inlined_call_operand.vmem [shape: f32[2,8,1], index: 3, kind: input, shape index: {}]
  %s4 = inlined_call_operand.hbm [shape: bf16[32,64], index: 4, kind: input, shape index: {}]
  %s5 = inlined_call_operand.vmem [shape: f32[1,64], index: 5, kind: input, shape index: {}]
  %s6 = inlined_call_operand.vmem [shape: f32[1,64], index: 6, kind: input, shape index: {}]
  %s7 = inlined_call_operand.vmem [shape: f32[1,64], index: 7, kind: input, shape index: {}]
  %s8 = inlined_call_operand.vmem [shape: bf16[64,64], index: 8, kind: input, shape index: {}]
  %s9 = inlined_call_operand.vmem [shape: f32[1,64], index: 9, kind: input, shape index: {}]
  %s10 = inlined_call_operand.vmem [shape: f32[1,64], index: 10, kind: input, shape index: {}]
  %s11 = inlined_call_operand.vmem [shape: f32[1,64], index: 11, kind: input, shape index: {}]
  %s12 = inlined_call_operand.vmem [shape: bf16[64,64], index: 12, kind: input, shape index: {}]
  %s13 = inlined_call_operand.vmem [shape: f32[1,64], index: 13, kind: input, shape index: {}]
  %s14 = inlined_call_operand.vmem [shape: f32[1,64], index: 14, kind: input, shape index: {}]
  %s15 = inlined_call_operand.vmem [shape: f32[1,64], index: 15, kind: input, shape index: {}]
  %s16 = inlined_call_operand.vmem [shape: bf16[64,16], index: 16, kind: input, shape index: {}]
  %s17 = inlined_call_operand.vmem [shape: f32[1,16], index: 17, kind: input, shape index: {}]
  %s18 = inlined_call_operand.hbm [shape: f32[2,8,32], index: 18, kind: output, shape index: {0}]
  %s19 = inlined_call_operand.hbm [shape: bf16[2,8,8], index: 19, kind: output, shape index: {1}]
  %20 = xla_tuple %s18, %s19
  %s21 = sld [smem:[#allocation0]]
  $region121: #{tpu_custom_call.1} parent=0
    _
  %s23 = ssub.s32 1, %s21
  %s24 = scalar_select 0, %s23, %s21
  $region1: #{tpu_custom_call.1} parent=0
    #allocation2 [shape = 'u8[1024]{0}', space=vmem, size = 0x400, scoped, tag = 'input window, operand 2']
    #allocation3 [shape = 's32[2]{0}', space=sflag, size = 0x8, scoped, tag = 'scoped memory for tpu_custom_call.1']
    #allocation4 [shape = 's32[2]{0}', space=sflag, size = 0x8, scoped, tag = 'scoped memory for tpu_custom_call.1']
    #allocation5 [shape = 'u8[8192]{0}', space=vmem, size = 0x2000, scoped, tag = 'input window, operand 4, single buffered']
    #allocation6 [shape = 's32[1]{0}', space=sflag, size = 0x4, scoped, tag = 'scoped memory for tpu_custom_call.1']
    #allocation7 [shape = 'u8[8192]{0}', space=vmem, size = 0x2000, scoped, tag = 'output window, operand 0']
    #allocation8 [shape = 'u8[4096]{0}', space=vmem, size = 0x1000, scoped, tag = 'output window, operand 1']
    #allocation9 [shape = 's32[2]{0}', space=sflag, size = 0x8, scoped, tag = 'scoped memory for tpu_custom_call.1']
    %25 = vsyncpa [#allocation3], 0
    %s26 = scalar_lea.sflag [#allocation3], 1
    %27 = vsyncpa %s26, 0
    %28 = vsyncpa [#allocation6], 0
    %29 = vsyncpa [#allocation4], 0
    %s30 = scalar_lea.sflag [#allocation4], 1
    %31 = vsyncpa %s30, 0
    %32 = vsyncpa [#allocation9], 0
    %s33 = scalar_lea.sflag [#allocation9], 1
    %34 = vsyncpa %s33, 0
    loop: start=0, step=1, limit=4
    $region2: #{tpu_custom_call.1} parent=1 // loop_pre_header
      _
    $region3: #{tpu_custom_call.1} parent=1 // loop_header
      %s36 = sphi 0, %s40
      %p37 = scmp.ge.s32.totalorder %s36, 4
      %s46 = sphi 0, %s48
      %s49 = sphi 0, %s46
      %s50 = sphi 0, %s49
      %s66 = sphi 0, %s50
      %s72 = sphi 0, %s74
      %s75 = sphi 0, %s72
      %s76 = sphi 0, %s75
      %s92 = sphi 0, %s76
      %s98 = sphi 0, %s100
      %s101 = sphi 0, %s98
      %s102 = sphi 0, %s101
      %s118 = sphi 0, %s102
      %s124 = sphi 0, %s126
      %s127 = sphi 0, %s124
      %s128 = sphi 0, %s127
      %s144 = sphi 0, %s128
      %s148 = sphi 0, %s148
      %s150 = sphi 0, %s148
      %s151 = sphi 0, %s150
      %s165 = sphi 0, %s151
      %s169 = sphi 0, %s169
      %s171 = sphi 0, %s169
      %s172 = sphi 0, %s171
      %s186 = sphi 0, %s172
      %s190 = sphi 0, %s190
      %s192 = sphi 0, %s190
      %s193 = sphi 0, %s192
      %s207 = sphi 0, %s193
      %s211 = sphi 0, %s211
      %s213 = sphi 0, %s211
      %s214 = sphi 0, %s213
      %s228 = sphi 0, %s214
      %s232 = sphi 0, %s232
      %s234 = sphi 0, %s232
      %s235 = sphi 0, %s234
      %s249 = sphi 0, %s235
      %s253 = sphi 0, %s253
      %s255 = sphi 0, %s253
      %s256 = sphi 0, %s255
      %s270 = sphi 0, %s256
      %s274 = sphi 0, %s274
      %s276 = sphi 0, %s274
      %s277 = sphi 0, %s276
      %s291 = sphi 0, %s277
      %s295 = sphi 0, %s295
      %s297 = sphi 0, %s295
      %s298 = sphi 0, %s297
      %s312 = sphi 0, %s298
      %s316 = sphi 0, %s316
      %s318 = sphi 0, %s316
      %s319 = sphi 0, %s318
      %s333 = sphi 0, %s319
      %s337 = sphi 0, %s337
      %s339 = sphi 0, %s337
      %s340 = sphi 0, %s339
      %s354 = sphi 0, %s340
      %s358 = sphi 0, %s358
      %s360 = sphi 0, %s358
      %s361 = sphi 0, %s360
      %s375 = sphi 0, %s361
      %s379 = sphi 0, %s379
      %s381 = sphi 0, %s379
      %s382 = sphi 0, %s381
      %s396 = sphi 0, %s382
      %s400 = sphi 0, %s400
      %s402 = sphi 0, %s400
      %s403 = sphi 0, %s402
      %s417 = sphi 0, %s403
      %s421 = sphi 0, %s421
      %s423 = sphi 0, %s421
      %s424 = sphi 0, %s423
      %s438 = sphi 0, %s424
      %s444 = sphi 0, %s446
      %s447 = sphi 0, %s444
      %s448 = sphi 0, %s447
      %s464 = sphi 0, %s448
      %s470 = sphi 0, %s472
      %s473 = sphi 0, %s470
      %s474 = sphi 0, %s473
      %s490 = sphi 0, %s474
    $region4: #{tpu_custom_call.1} parent=1 // loop_header_branch
      %39 = sbr.rel (%p37) target = $region8
    $region5: #{tpu_custom_call.1} parent=1 // loop_body
      %s41 = ssub.s32 %s36, 1
      %s42 = ssub.s32 %s36, 2
      %s43 = sadd.s32 %s36, 1
      %s44 = ssub.s32 %s36, %s43
      %p45 = scmp.eq.s32.totalorder %s44, 0
      %s47 = sadd.s32 %s46, 1
      %s48 = scalar_select %p45, %s46, %s47
      %p51 = pneg %p45
      %p52 = scmp.eq.s32.totalorder %s36, 1
      %p53 = por %p51, %p52
      %p54 = scmp.ne.s32.totalorder %s46, %s49
      %p55 = scmp.eq.s32.totalorder %s36, 0
      %p56 = por %p54, %p55
      %p57 = scmp.ne.s32.totalorder %s46, %s49
      %p58 = scmp.eq.s32.totalorder %s41, 1
      %p59 = por %p57, %p58
      %p60 = scmp.ne.s32.totalorder %s49, %s50
      %p61 = scmp.eq.s32.totalorder %s41, 0
      %p62 = por %p60, %p61
      %p63 = scmp.ne.s32.totalorder %s49, %s50
      %p64 = scmp.eq.s32.totalorder %s42, 1
      %p65 = por %p63, %p64
      %p67 = scmp.ne.s32.totalorder %s50, %s66
      %p68 = scmp.eq.s32.totalorder %s42, 0
      %p69 = por %p67, %p68
      %s70 = ssub.s32 %s36, %s43
      %p71 = scmp.eq.s32.totalorder %s70, 0
      %s73 = sadd.s32 %s72, 1
      %s74 = scalar_select %p71, %s72, %s73
      %p77 = pneg %p71
      %p78 = scmp.eq.s32.totalorder %s36, 1
      %p79 = por %p77, %p78
      %p80 = scmp.ne.s32.totalorder %s72, %s75
      %p81 = scmp.eq.s32.totalorder %s36, 0
      %p82 = por %p80, %p81
      %p83 = scmp.ne.s32.totalorder %s72, %s75
      %p84 = scmp.eq.s32.totalorder %s41, 1
      %p85 = por %p83, %p84
      %p86 = scmp.ne.s32.totalorder %s75, %s76
      %p87 = scmp.eq.s32.totalorder %s41, 0
      %p88 = por %p86, %p87
      %p89 = scmp.ne.s32.totalorder %s75, %s76
      %p90 = scmp.eq.s32.totalorder %s42, 1
      %p91 = por %p89, %p90
      %p93 = scmp.ne.s32.totalorder %s76, %s92
      %p94 = scmp.eq.s32.totalorder %s42, 0
      %p95 = por %p93, %p94
      %s96 = ssub.s32 %s36, %s43
      %p97 = scmp.eq.s32.totalorder %s96, 0
      %s99 = sadd.s32 %s98, 1
      %s100 = scalar_select %p97, %s98, %s99
      %p103 = pneg %p97
      %p104 = scmp.eq.s32.totalorder %s36, 1
      %p105 = por %p103, %p104
      %p106 = scmp.ne.s32.totalorder %s98, %s101
      %p107 = scmp.eq.s32.totalorder %s36, 0
      %p108 = por %p106, %p107
      %p109 = scmp.ne.s32.totalorder %s98, %s101
      %p110 = scmp.eq.s32.totalorder %s41, 1
      %p111 = por %p109, %p110
      %p112 = scmp.ne.s32.totalorder %s101, %s102
      %p113 = scmp.eq.s32.totalorder %s41, 0
      %p114 = por %p112, %p113
      %p115 = scmp.ne.s32.totalorder %s101, %s102
      %p116 = scmp.eq.s32.totalorder %s42, 1
      %p117 = por %p115, %p116
      %p119 = scmp.ne.s32.totalorder %s102, %s118
      %p120 = scmp.eq.s32.totalorder %s42, 0
      %p121 = por %p119, %p120
      %s122 = ssub.s32 %s36, %s43
      %p123 = scmp.eq.s32.totalorder %s122, 0
      %s125 = sadd.s32 %s124, 1
      %s126 = scalar_select %p123, %s124, %s125
      %p129 = pneg %p123
      %p130 = scmp.eq.s32.totalorder %s36, 1
      %p131 = por %p129, %p130
      %p132 = scmp.ne.s32.totalorder %s124, %s127
      %p133 = scmp.eq.s32.totalorder %s36, 0
      %p134 = por %p132, %p133
      %p135 = scmp.ne.s32.totalorder %s124, %s127
      %p136 = scmp.eq.s32.totalorder %s41, 1
      %p137 = por %p135, %p136
      %p138 = scmp.ne.s32.totalorder %s127, %s128
      %p139 = scmp.eq.s32.totalorder %s41, 0
      %p140 = por %p138, %p139
      %p141 = scmp.ne.s32.totalorder %s127, %s128
      %p142 = scmp.eq.s32.totalorder %s42, 1
      %p143 = por %p141, %p142
      %p145 = scmp.ne.s32.totalorder %s128, %s144
      %p146 = scmp.eq.s32.totalorder %s42, 0
      %p147 = por %p145, %p146
      %s149 = sadd.s32 %s148, 1
      %p152 = scmp.eq.s32.totalorder %s36, 1
      %p153 = scmp.ne.s32.totalorder %s148, %s150
      %p154 = scmp.eq.s32.totalorder %s36, 0
      %p155 = por %p153, %p154
      %p156 = scmp.ne.s32.totalorder %s148, %s150
      %p157 = scmp.eq.s32.totalorder %s41, 1
      %p158 = por %p156, %p157
      %p159 = scmp.ne.s32.totalorder %s150, %s151
      %p160 = scmp.eq.s32.totalorder %s41, 0
      %p161 = por %p159, %p160
      %p162 = scmp.ne.s32.totalorder %s150, %s151
      %p163 = scmp.eq.s32.totalorder %s42, 1
      %p164 = por %p162, %p163
      %p166 = scmp.ne.s32.totalorder %s151, %s165
      %p167 = scmp.eq.s32.totalorder %s42, 0
      %p168 = por %p166, %p167
      %s170 = sadd.s32 %s169, 1
      %p173 = scmp.eq.s32.totalorder %s36, 1
      %p174 = scmp.ne.s32.totalorder %s169, %s171
      %p175 = scmp.eq.s32.totalorder %s36, 0
      %p176 = por %p174, %p175
      %p177 = scmp.ne.s32.totalorder %s169, %s171
      %p178 = scmp.eq.s32.totalorder %s41, 1
      %p179 = por %p177, %p178
      %p180 = scmp.ne.s32.totalorder %s171, %s172
      %p181 = scmp.eq.s32.totalorder %s41, 0
      %p182 = por %p180, %p181
      %p183 = scmp.ne.s32.totalorder %s171, %s172
      %p184 = scmp.eq.s32.totalorder %s42, 1
      %p185 = por %p183, %p184
      %p187 = scmp.ne.s32.totalorder %s172, %s186
      %p188 = scmp.eq.s32.totalorder %s42, 0
      %p189 = por %p187, %p188
      %s191 = sadd.s32 %s190, 1
      %p194 = scmp.eq.s32.totalorder %s36, 1
      %p195 = scmp.ne.s32.totalorder %s190, %s192
      %p196 = scmp.eq.s32.totalorder %s36, 0
      %p197 = por %p195, %p196
      %p198 = scmp.ne.s32.totalorder %s190, %s192
      %p199 = scmp.eq.s32.totalorder %s41, 1
      %p200 = por %p198, %p199
      %p201 = scmp.ne.s32.totalorder %s192, %s193
      %p202 = scmp.eq.s32.totalorder %s41, 0
      %p203 = por %p201, %p202
      %p204 = scmp.ne.s32.totalorder %s192, %s193
      %p205 = scmp.eq.s32.totalorder %s42, 1
      %p206 = por %p204, %p205
      %p208 = scmp.ne.s32.totalorder %s193, %s207
      %p209 = scmp.eq.s32.totalorder %s42, 0
      %p210 = por %p208, %p209
      %s212 = sadd.s32 %s211, 1
      %p215 = scmp.eq.s32.totalorder %s36, 1
      %p216 = scmp.ne.s32.totalorder %s211, %s213
      %p217 = scmp.eq.s32.totalorder %s36, 0
      %p218 = por %p216, %p217
      %p219 = scmp.ne.s32.totalorder %s211, %s213
      %p220 = scmp.eq.s32.totalorder %s41, 1
      %p221 = por %p219, %p220
      %p222 = scmp.ne.s32.totalorder %s213, %s214
      %p223 = scmp.eq.s32.totalorder %s41, 0
      %p224 = por %p222, %p223
      %p225 = scmp.ne.s32.totalorder %s213, %s214
      %p226 = scmp.eq.s32.totalorder %s42, 1
      %p227 = por %p225, %p226
      %p229 = scmp.ne.s32.totalorder %s214, %s228
      %p230 = scmp.eq.s32.totalorder %s42, 0
      %p231 = por %p229, %p230
      %s233 = sadd.s32 %s232, 1
      %p236 = scmp.eq.s32.totalorder %s36, 1
      %p237 = scmp.ne.s32.totalorder %s232, %s234
      %p238 = scmp.eq.s32.totalorder %s36, 0
      %p239 = por %p237, %p238
      %p240 = scmp.ne.s32.totalorder %s232, %s234
      %p241 = scmp.eq.s32.totalorder %s41, 1
      %p242 = por %p240, %p241
      %p243 = scmp.ne.s32.totalorder %s234, %s235
      %p244 = scmp.eq.s32.totalorder %s41, 0
      %p245 = por %p243, %p244
      %p246 = scmp.ne.s32.totalorder %s234, %s235
      %p247 = scmp.eq.s32.totalorder %s42, 1
      %p248 = por %p246, %p247
      %p250 = scmp.ne.s32.totalorder %s235, %s249
      %p251 = scmp.eq.s32.totalorder %s42, 0
      %p252 = por %p250, %p251
      %s254 = sadd.s32 %s253, 1
      %p257 = scmp.eq.s32.totalorder %s36, 1
      %p258 = scmp.ne.s32.totalorder %s253, %s255
      %p259 = scmp.eq.s32.totalorder %s36, 0
      %p260 = por %p258, %p259
      %p261 = scmp.ne.s32.totalorder %s253, %s255
      %p262 = scmp.eq.s32.totalorder %s41, 1
      %p263 = por %p261, %p262
      %p264 = scmp.ne.s32.totalorder %s255, %s256
      %p265 = scmp.eq.s32.totalorder %s41, 0
      %p266 = por %p264, %p265
      %p267 = scmp.ne.s32.totalorder %s255, %s256
      %p268 = scmp.eq.s32.totalorder %s42, 1
      %p269 = por %p267, %p268
      %p271 = scmp.ne.s32.totalorder %s256, %s270
      %p272 = scmp.eq.s32.totalorder %s42, 0
      %p273 = por %p271, %p272
      %s275 = sadd.s32 %s274, 1
      %p278 = scmp.eq.s32.totalorder %s36, 1
      %p279 = scmp.ne.s32.totalorder %s274, %s276
      %p280 = scmp.eq.s32.totalorder %s36, 0
      %p281 = por %p279, %p280
      %p282 = scmp.ne.s32.totalorder %s274, %s276
      %p283 = scmp.eq.s32.totalorder %s41, 1
      %p284 = por %p282, %p283
      %p285 = scmp.ne.s32.totalorder %s276, %s277
      %p286 = scmp.eq.s32.totalorder %s41, 0
      %p287 = por %p285, %p286
      %p288 = scmp.ne.s32.totalorder %s276, %s277
      %p289 = scmp.eq.s32.totalorder %s42, 1
      %p290 = por %p288, %p289
      %p292 = scmp.ne.s32.totalorder %s277, %s291
      %p293 = scmp.eq.s32.totalorder %s42, 0
      %p294 = por %p292, %p293
      %s296 = sadd.s32 %s295, 1
      %p299 = scmp.eq.s32.totalorder %s36, 1
      %p300 = scmp.ne.s32.totalorder %s295, %s297
      %p301 = scmp.eq.s32.totalorder %s36, 0
      %p302 = por %p300, %p301
      %p303 = scmp.ne.s32.totalorder %s295, %s297
      %p304 = scmp.eq.s32.totalorder %s41, 1
      %p305 = por %p303, %p304
      %p306 = scmp.ne.s32.totalorder %s297, %s298
      %p307 = scmp.eq.s32.totalorder %s41, 0
      %p308 = por %p306, %p307
      %p309 = scmp.ne.s32.totalorder %s297, %s298
      %p310 = scmp.eq.s32.totalorder %s42, 1
      %p311 = por %p309, %p310
      %p313 = scmp.ne.s32.totalorder %s298, %s312
      %p314 = scmp.eq.s32.totalorder %s42, 0
      %p315 = por %p313, %p314
      %s317 = sadd.s32 %s316, 1
      %p320 = scmp.eq.s32.totalorder %s36, 1
      %p321 = scmp.ne.s32.totalorder %s316, %s318
      %p322 = scmp.eq.s32.totalorder %s36, 0
      %p323 = por %p321, %p322
      %p324 = scmp.ne.s32.totalorder %s316, %s318
      %p325 = scmp.eq.s32.totalorder %s41, 1
      %p326 = por %p324, %p325
      %p327 = scmp.ne.s32.totalorder %s318, %s319
      %p328 = scmp.eq.s32.totalorder %s41, 0
      %p329 = por %p327, %p328
      %p330 = scmp.ne.s32.totalorder %s318, %s319
      %p331 = scmp.eq.s32.totalorder %s42, 1
      %p332 = por %p330, %p331
      %p334 = scmp.ne.s32.totalorder %s319, %s333
      %p335 = scmp.eq.s32.totalorder %s42, 0
      %p336 = por %p334, %p335
      %s338 = sadd.s32 %s337, 1
      %p341 = scmp.eq.s32.totalorder %s36, 1
      %p342 = scmp.ne.s32.totalorder %s337, %s339
      %p343 = scmp.eq.s32.totalorder %s36, 0
      %p344 = por %p342, %p343
      %p345 = scmp.ne.s32.totalorder %s337, %s339
      %p346 = scmp.eq.s32.totalorder %s41, 1
      %p347 = por %p345, %p346
      %p348 = scmp.ne.s32.totalorder %s339, %s340
      %p349 = scmp.eq.s32.totalorder %s41, 0
      %p350 = por %p348, %p349
      %p351 = scmp.ne.s32.totalorder %s339, %s340
      %p352 = scmp.eq.s32.totalorder %s42, 1
      %p353 = por %p351, %p352
      %p355 = scmp.ne.s32.totalorder %s340, %s354
      %p356 = scmp.eq.s32.totalorder %s42, 0
      %p357 = por %p355, %p356
      %s359 = sadd.s32 %s358, 1
      %p362 = scmp.eq.s32.totalorder %s36, 1
      %p363 = scmp.ne.s32.totalorder %s358, %s360
      %p364 = scmp.eq.s32.totalorder %s36, 0
      %p365 = por %p363, %p364
      %p366 = scmp.ne.s32.totalorder %s358, %s360
      %p367 = scmp.eq.s32.totalorder %s41, 1
      %p368 = por %p366, %p367
      %p369 = scmp.ne.s32.totalorder %s360, %s361
      %p370 = scmp.eq.s32.totalorder %s41, 0
      %p371 = por %p369, %p370
      %p372 = scmp.ne.s32.totalorder %s360, %s361
      %p373 = scmp.eq.s32.totalorder %s42, 1
      %p374 = por %p372, %p373
      %p376 = scmp.ne.s32.totalorder %s361, %s375
      %p377 = scmp.eq.s32.totalorder %s42, 0
      %p378 = por %p376, %p377
      %s380 = sadd.s32 %s379, 1
      %p383 = scmp.eq.s32.totalorder %s36, 1
      %p384 = scmp.ne.s32.totalorder %s379, %s381
      %p385 = scmp.eq.s32.totalorder %s36, 0
      %p386 = por %p384, %p385
      %p387 = scmp.ne.s32.totalorder %s379, %s381
      %p388 = scmp.eq.s32.totalorder %s41, 1
      %p389 = por %p387, %p388
      %p390 = scmp.ne.s32.totalorder %s381, %s382
      %p391 = scmp.eq.s32.totalorder %s41, 0
      %p392 = por %p390, %p391
      %p393 = scmp.ne.s32.totalorder %s381, %s382
      %p394 = scmp.eq.s32.totalorder %s42, 1
      %p395 = por %p393, %p394
      %p397 = scmp.ne.s32.totalorder %s382, %s396
      %p398 = scmp.eq.s32.totalorder %s42, 0
      %p399 = por %p397, %p398
      %s401 = sadd.s32 %s400, 1
      %p404 = scmp.eq.s32.totalorder %s36, 1
      %p405 = scmp.ne.s32.totalorder %s400, %s402
      %p406 = scmp.eq.s32.totalorder %s36, 0
      %p407 = por %p405, %p406
      %p408 = scmp.ne.s32.totalorder %s400, %s402
      %p409 = scmp.eq.s32.totalorder %s41, 1
      %p410 = por %p408, %p409
      %p411 = scmp.ne.s32.totalorder %s402, %s403
      %p412 = scmp.eq.s32.totalorder %s41, 0
      %p413 = por %p411, %p412
      %p414 = scmp.ne.s32.totalorder %s402, %s403
      %p415 = scmp.eq.s32.totalorder %s42, 1
      %p416 = por %p414, %p415
      %p418 = scmp.ne.s32.totalorder %s403, %s417
      %p419 = scmp.eq.s32.totalorder %s42, 0
      %p420 = por %p418, %p419
      %s422 = sadd.s32 %s421, 1
      %p425 = scmp.eq.s32.totalorder %s36, 1
      %p426 = scmp.ne.s32.totalorder %s421, %s423
      %p427 = scmp.eq.s32.totalorder %s36, 0
      %p428 = por %p426, %p427
      %p429 = scmp.ne.s32.totalorder %s421, %s423
      %p430 = scmp.eq.s32.totalorder %s41, 1
      %p431 = por %p429, %p430
      %p432 = scmp.ne.s32.totalorder %s423, %s424
      %p433 = scmp.eq.s32.totalorder %s41, 0
      %p434 = por %p432, %p433
      %p435 = scmp.ne.s32.totalorder %s423, %s424
      %p436 = scmp.eq.s32.totalorder %s42, 1
      %p437 = por %p435, %p436
      %p439 = scmp.ne.s32.totalorder %s424, %s438
      %p440 = scmp.eq.s32.totalorder %s42, 0
      %p441 = por %p439, %p440
      %s442 = ssub.s32 %s36, %s43
      %p443 = scmp.eq.s32.totalorder %s442, 0
      %s445 = sadd.s32 %s444, 1
      %s446 = scalar_select %p443, %s444, %s445
      %p449 = pneg %p443
      %p450 = scmp.eq.s32.totalorder %s36, 1
      %p451 = por %p449, %p450
      %p452 = scmp.ne.s32.totalorder %s444, %s447
      %p453 = scmp.eq.s32.totalorder %s36, 0
      %p454 = por %p452, %p453
      %p455 = scmp.ne.s32.totalorder %s444, %s447
      %p456 = scmp.eq.s32.totalorder %s41, 1
      %p457 = por %p455, %p456
      %p458 = scmp.ne.s32.totalorder %s447, %s448
      %p459 = scmp.eq.s32.totalorder %s41, 0
      %p460 = por %p458, %p459
      %p461 = scmp.ne.s32.totalorder %s447, %s448
      %p462 = scmp.eq.s32.totalorder %s42, 1
      %p463 = por %p461, %p462
      %p465 = scmp.ne.s32.totalorder %s448, %s464
      %p466 = scmp.eq.s32.totalorder %s42, 0
      %p467 = por %p465, %p466
      %s468 = ssub.s32 %s36, %s43
      %p469 = scmp.eq.s32.totalorder %s468, 0
      %s471 = sadd.s32 %s470, 1
      %s472 = scalar_select %p469, %s470, %s471
      %p475 = pneg %p469
      %p476 = scmp.eq.s32.totalorder %s36, 1
      %p477 = por %p475, %p476
      %p478 = scmp.ne.s32.totalorder %s470, %s473
      %p479 = scmp.eq.s32.totalorder %s36, 0
      %p480 = por %p478, %p479
      %p481 = scmp.ne.s32.totalorder %s470, %s473
      %p482 = scmp.eq.s32.totalorder %s41, 1
      %p483 = por %p481, %p482
      %p484 = scmp.ne.s32.totalorder %s473, %s474
      %p485 = scmp.eq.s32.totalorder %s41, 0
      %p486 = por %p484, %p485
      %p487 = scmp.ne.s32.totalorder %s473, %s474
      %p488 = scmp.eq.s32.totalorder %s42, 1
      %p489 = por %p487, %p488
      %p491 = scmp.ne.s32.totalorder %s474, %s490
      %p492 = scmp.eq.s32.totalorder %s42, 0
      %p493 = por %p491, %p492
      %p494 = scmp.le.s32.totalorder 1, %s36
      %p495 = scmp.lt.s32.totalorder %s36, 3
      %p496 = pnand %p494, %p495
      %p497 = pneg %p496
      // Predicated region
      $region9: #{tpu_custom_call.1} parent=5 // pred_check
        _
      $region10: #{tpu_custom_call.1} parent=5 // pred_check_branch
        %499 = sbr.rel (%p496) target = $region12
      $region11: #{tpu_custom_call.1} parent=5 // pred_region
        %s500 = ssub.s32 %s36, 1
        // Predicated region
        $region13: #{tpu_custom_call.1} parent=11 // pred_check
          %p501 = pneg %p161
        $region14: #{tpu_custom_call.1} parent=11 // pred_check_branch
          %503 = sbr.rel (%p501) target = $region16
        $region15: #{tpu_custom_call.1} parent=11 // pred_region
          %s505 = ssub.s32 256, 256
          %506 = vsyncadd [#allocation6], %s505
          %s507 = sshll.u32 [#allocation5], 4
          %s508 = int_to_ptr.vmem [resolvable:$true] %s507
          %513 = dma.hbm_to_vmem [thread:$0]  %s4, 256, %s508, [#allocation6], 64, 64, 4
        $region16: #{tpu_custom_call.1} parent=11 // pred_fallthru
          _
        // Predicated region
        $region17: #{tpu_custom_call.1} parent=11 // pred_check
          %p514 = pneg %p182
        $region18: #{tpu_custom_call.1} parent=11 // pred_check_branch
          %516 = sbr.rel (%p514) target = $region20
        $region19: #{tpu_custom_call.1} parent=11 // pred_region
          _
        $region20: #{tpu_custom_call.1} parent=11 // pred_fallthru
          _
        // Predicated region
        $region21: #{tpu_custom_call.1} parent=11 // pred_check
          %p517 = pneg %p203
        $region22: #{tpu_custom_call.1} parent=11 // pred_check_branch
          %519 = sbr.rel (%p517) target = $region24
        $region23: #{tpu_custom_call.1} parent=11 // pred_region
          _
        $region24: #{tpu_custom_call.1} parent=11 // pred_fallthru
          _
        // Predicated region
        $region25: #{tpu_custom_call.1} parent=11 // pred_check
          %p520 = pneg %p224
        $region26: #{tpu_custom_call.1} parent=11 // pred_check_branch
          %522 = sbr.rel (%p520) target = $region28
        $region27: #{tpu_custom_call.1} parent=11 // pred_region
          _
        $region28: #{tpu_custom_call.1} parent=11 // pred_fallthru
          _
        // Predicated region
        $region29: #{tpu_custom_call.1} parent=11 // pred_check
          %p523 = pneg %p245
        $region30: #{tpu_custom_call.1} parent=11 // pred_check_branch
          %525 = sbr.rel (%p523) target = $region32
        $region31: #{tpu_custom_call.1} parent=11 // pred_region
          _
        $region32: #{tpu_custom_call.1} parent=11 // pred_fallthru
          _
        // Predicated region
        $region33: #{tpu_custom_call.1} parent=11 // pred_check
          %p526 = pneg %p266
        $region34: #{tpu_custom_call.1} parent=11 // pred_check_branch
          %528 = sbr.rel (%p526) target = $region36
        $region35: #{tpu_custom_call.1} parent=11 // pred_region
          _
        $region36: #{tpu_custom_call.1} parent=11 // pred_fallthru
          _
        // Predicated region
        $region37: #{tpu_custom_call.1} parent=11 // pred_check
          %p529 = pneg %p287
        $region38: #{tpu_custom_call.1} parent=11 // pred_check_branch
          %531 = sbr.rel (%p529) target = $region40
        $region39: #{tpu_custom_call.1} parent=11 // pred_region
          _
        $region40: #{tpu_custom_call.1} parent=11 // pred_fallthru
          _
        // Predicated region
        $region41: #{tpu_custom_call.1} parent=11 // pred_check
          %p532 = pneg %p308
        $region42: #{tpu_custom_call.1} parent=11 // pred_check_branch
          %534 = sbr.rel (%p532) target = $region44
        $region43: #{tpu_custom_call.1} parent=11 // pred_region
          _
        $region44: #{tpu_custom_call.1} parent=11 // pred_fallthru
          _
        // Predicated region
        $region45: #{tpu_custom_call.1} parent=11 // pred_check
          %p535 = pneg %p329
        $region46: #{tpu_custom_call.1} parent=11 // pred_check_branch
          %537 = sbr.rel (%p535) target = $region48
        $region47: #{tpu_custom_call.1} parent=11 // pred_region
          _
        $region48: #{tpu_custom_call.1} parent=11 // pred_fallthru
          _
        // Predicated region
        $region49: #{tpu_custom_call.1} parent=11 // pred_check
          %p538 = pneg %p350
        $region50: #{tpu_custom_call.1} parent=11 // pred_check_branch
          %540 = sbr.rel (%p538) target = $region52
        $region51: #{tpu_custom_call.1} parent=11 // pred_region
          _
        $region52: #{tpu_custom_call.1} parent=11 // pred_fallthru
          _
        // Predicated region
        $region53: #{tpu_custom_call.1} parent=11 // pred_check
          %p541 = pneg %p371
        $region54: #{tpu_custom_call.1} parent=11 // pred_check_branch
          %543 = sbr.rel (%p541) target = $region56
        $region55: #{tpu_custom_call.1} parent=11 // pred_region
          _
        $region56: #{tpu_custom_call.1} parent=11 // pred_fallthru
          _
        // Predicated region
        $region57: #{tpu_custom_call.1} parent=11 // pred_check
          %p544 = pneg %p392
        $region58: #{tpu_custom_call.1} parent=11 // pred_check_branch
          %546 = sbr.rel (%p544) target = $region60
        $region59: #{tpu_custom_call.1} parent=11 // pred_region
          _
        $region60: #{tpu_custom_call.1} parent=11 // pred_fallthru
          _
        // Predicated region
        $region61: #{tpu_custom_call.1} parent=11 // pred_check
          %p547 = pneg %p413
        $region62: #{tpu_custom_call.1} parent=11 // pred_check_branch
          %549 = sbr.rel (%p547) target = $region64
        $region63: #{tpu_custom_call.1} parent=11 // pred_region
          _
        $region64: #{tpu_custom_call.1} parent=11 // pred_fallthru
          _
        // Predicated region
        $region65: #{tpu_custom_call.1} parent=11 // pred_check
          %p550 = pneg %p434
        $region66: #{tpu_custom_call.1} parent=11 // pred_check_branch
          %552 = sbr.rel (%p550) target = $region68
        $region67: #{tpu_custom_call.1} parent=11 // pred_region
          _
        $region68: #{tpu_custom_call.1} parent=11 // pred_fallthru
          _
      $region12: #{tpu_custom_call.1} parent=5 // pred_fallthru
        _
      %p553 = scmp.lt.s32.totalorder %s36, 2
      // Predicated region
      $region69: #{tpu_custom_call.1} parent=5 // pred_check
        %p554 = pneg %p553
      $region70: #{tpu_custom_call.1} parent=5 // pred_check_branch
        %556 = sbr.rel (%p554) target = $region72
      $region71: #{tpu_custom_call.1} parent=5 // pred_region
        // Predicated region
        $region73: #{tpu_custom_call.1} parent=71 // pred_check
          %p557 = pneg %p56
        $region74: #{tpu_custom_call.1} parent=71 // pred_check_branch
          %559 = sbr.rel (%p557) target = $region76
        $region75: #{tpu_custom_call.1} parent=71 // pred_region
          %p560 = scmp.lt.s32.totalorder %s36, 1
          %s561 = scalar_select %p560, %s36, 1
          %s562 = smul.addr %s561, 8
          %s563 = scalar_lea.vmem %s0, %s562
        $region76: #{tpu_custom_call.1} parent=71 // pred_fallthru
          _
        // Predicated region
        $region77: #{tpu_custom_call.1} parent=71 // pred_check
          %p564 = pneg %p82
        $region78: #{tpu_custom_call.1} parent=71 // pred_check_branch
          %566 = sbr.rel (%p564) target = $region80
        $region79: #{tpu_custom_call.1} parent=71 // pred_region
          %p567 = scmp.lt.s32.totalorder %s36, 1
          %s568 = scalar_select %p567, %s36, 1
          %s569 = smul.addr %s568, 2
          %s570 = smul.addr %s569, 4
          %s571 = scalar_lea.vmem %s1, %s570
        $region80: #{tpu_custom_call.1} parent=71 // pred_fallthru
          _
        // Predicated region
        $region81: #{tpu_custom_call.1} parent=71 // pred_check
          %p572 = pneg %p108
        $region82: #{tpu_custom_call.1} parent=71 // pred_check_branch
          %574 = sbr.rel (%p572) target = $region84
        $region83: #{tpu_custom_call.1} parent=71 // pred_region
          %s575 = sand.u32 %s98, 1
          %s576 = scalar_lea.sflag [#allocation3], %s575
          %s577 = sand.u32 %s98, 1
          %s578 = scalar_lea.vmem [#allocation2], %s577
          %s580 = ssub.s32 16, 16
          %581 = vsyncadd %s576, %s580
          %s582 = smul.addr %s36, 16
          %s583 = scalar_lea.hbm %s2, %s582
          %s585 = sshll.u32 %s578, 4
          %s586 = int_to_ptr.vmem [resolvable:$true] %s585
          %588 = dma.hbm_to_vmem [thread:$0]  %s583, 16, %s586, %s576
        $region84: #{tpu_custom_call.1} parent=71 // pred_fallthru
          _
        // Predicated region
        $region85: #{tpu_custom_call.1} parent=71 // pred_check
          %p589 = pneg %p134
        $region86: #{tpu_custom_call.1} parent=71 // pred_check_branch
          %591 = sbr.rel (%p589) target = $region88
        $region87: #{tpu_custom_call.1} parent=71 // pred_region
          %p592 = scmp.lt.s32.totalorder %s36, 1
          %s593 = scalar_select %p592, %s36, 1
          %s594 = smul.addr %s593, 8
          %s595 = scalar_lea.vmem %s3, %s594
        $region88: #{tpu_custom_call.1} parent=71 // pred_fallthru
          _
      $region72: #{tpu_custom_call.1} parent=5 // pred_fallthru
        _
      %p596 = scmp.le.s32.totalorder 1, %s36
      %p597 = scmp.lt.s32.totalorder %s36, 3
      %p598 = pnand %p596, %p597
      %p599 = pneg %p598
      // Predicated region
      $region89: #{tpu_custom_call.1} parent=5 // pred_check
        _
      $region90: #{tpu_custom_call.1} parent=5 // pred_check_branch
        %601 = sbr.rel (%p598) target = $region92
      $region91: #{tpu_custom_call.1} parent=5 // pred_region
        %s602 = ssub.s32 %s36, 1
        %s603 = sand.u32 %s101, 1
        %s604 = scalar_lea.sflag [#allocation3], %s603
        %s605 = sand.u32 %s101, 1
        %s606 = scalar_lea.vmem [#allocation2], %s605
        // Predicated region
        $region93: #{tpu_custom_call.1} parent=91 // pred_check
          %p607 = pneg %p114
        $region94: #{tpu_custom_call.1} parent=91 // pred_check_branch
          %609 = sbr.rel (%p607) target = $region96
        $region95: #{tpu_custom_call.1} parent=91 // pred_region
          %610 = dma.done %s604, 16
        $region96: #{tpu_custom_call.1} parent=91 // pred_fallthru
          _
        // Predicated region
        $region97: #{tpu_custom_call.1} parent=91 // pred_check
          %p611 = pneg %p161
        $region98: #{tpu_custom_call.1} parent=91 // pred_check_branch
          %613 = sbr.rel (%p611) target = $region100
        $region99: #{tpu_custom_call.1} parent=91 // pred_region
          %614 = dma.done [#allocation6], 256
        $region100: #{tpu_custom_call.1} parent=91 // pred_fallthru
          _
        %p615 = scmp.lt.s32.totalorder %s41, 1
        %s616 = scalar_select %p615, %s41, 1
        %s617 = smul.addr %s616, 8
        %s618 = scalar_lea.vmem %s0, %s617
        %p619 = pneg %p62
        %p620 = pneg %p59
        %p621 = scmp.lt.s32.totalorder %s41, 1
        %s622 = scalar_select %p621, %s41, 1
        %s623 = smul.addr %s622, 2
        %s624 = smul.addr %s623, 4
        %s625 = scalar_lea.vmem %s1, %s624
        %p626 = pneg %p88
        %p627 = pneg %p85
        %s628 = sand.u32 %s101, 1
        %s629 = scalar_lea.sflag [#allocation3], %s628
        %s630 = sand.u32 %s101, 1
        %s631 = scalar_lea.vmem [#allocation2], %s630
        %p632 = pneg %p114
        %p633 = pneg %p111
        %p634 = scmp.lt.s32.totalorder %s41, 1
        %s635 = scalar_select %p634, %s41, 1
        %s636 = smul.addr %s635, 8
        %s637 = scalar_lea.vmem %s3, %s636
        %p638 = pneg %p140
        %p639 = pneg %p137
        %p640 = pneg %p161
        %p641 = pneg %p158
        %p642 = pneg %p182
        %p643 = pneg %p179
        %p644 = pneg %p203
        %p645 = pneg %p200
        %p646 = pneg %p224
        %p647 = pneg %p221
        %p648 = pneg %p245
        %p649 = pneg %p242
        %p650 = pneg %p266
        %p651 = pneg %p263
        %p652 = pneg %p287
        %p653 = pneg %p284
        %p654 = pneg %p308
        %p655 = pneg %p305
        %p656 = pneg %p329
        %p657 = pneg %p326
        %p658 = pneg %p350
        %p659 = pneg %p347
        %p660 = pneg %p371
        %p661 = pneg %p368
        %p662 = pneg %p392
        %p663 = pneg %p389
        %p664 = pneg %p413
        %p665 = pneg %p410
        %p666 = pneg %p434
        %p667 = pneg %p431
        %p668 = pneg %p460
        %p669 = pneg %p457
        %s670 = sand.u32 %s447, 1
        %s671 = scalar_lea.sflag [#allocation4], %s670
        %s672 = sand.u32 %s447, 1
        %s673 = smul.addr %s672, 8
        %s674 = scalar_lea.vmem [#allocation7], %s673
        %p675 = pneg %p486
        %p676 = pneg %p483
        %s677 = sand.u32 %s473, 1
        %s678 = scalar_lea.sflag [#allocation9], %s677
        %s679 = sand.u32 %s473, 1
        %s680 = smul.addr %s679, 4
        %s681 = scalar_lea.vmem [#allocation8], %s680
        %p682 = scmp.lt.s32.totalorder %s41, 1
        %s683 = scalar_select %p682, %s41, 1
        %s684 = smul.addr %s683, 8
        %s685 = scalar_lea.vmem %s0, %s684
        %p686 = scmp.lt.s32.totalorder %s41, 1
        %s687 = scalar_select %p686, %s41, 1
        %s688 = smul.addr %s687, 2
        %s689 = smul.addr %s688, 4
        %s690 = scalar_lea.vmem %s1, %s689
        %p691 = scmp.lt.s32.totalorder %s41, 1
        %s692 = scalar_select %p691, %s41, 1
        %s693 = smul.addr %s692, 8
        %s694 = scalar_lea.vmem %s3, %s693
        %v696 = vld [vmem:[%s685] sm:$0xff]
        %vm697 = vcmask 261120
        %v698 = vsel %vm697, %v696, 0.0
        %v699 = vrot.slane %v698, 4
        %v700 = vadd.f32 %v698, %v699
        %v701 = vrot.slane %v700, 2
        %v702 = vadd.f32 %v700, %v701
        %v703 = vrot.slane %v702, 1
        %v704 = vadd.f32 %v702, %v703
        %v705 = vrcp.pop 8.0
        %v706 = vmul.f32 %v704, %v705
        %v707 = vsub.f32 %v696, %v706
        %v708 = vmul.f32 %v707, %v707
        %v709 = vsel %vm697, %v708, 0.0
        %v710 = vrot.slane %v709, 4
        %v711 = vadd.f32 %v709, %v710
        %v712 = vrot.slane %v711, 2
        %v713 = vadd.f32 %v711, %v712
        %v714 = vrot.slane %v713, 1
        %v715 = vadd.f32 %v713, %v714
        %v716 = vrcp.pop 7.0
        %v717 = vmul.f32 %v715, %v716
        %v718 = vrsqrt.pop %v717
        %v719 = vmul.f32 %v717, %v718
        %vm720 = vcmp.eq.f32.partialorder %v717, inf
        %v721 = vsel %vm720, %v717, %v719
        %vm722 = vcmp.eq.f32.partialorder %v717, 0.0
        %v723 = vand.u32 %v717, 2147483648
        %v724 = vsel %vm722, %v723, %v721
        %v725 = vadd.f32 %v724, 1e-06
        %v726 = vrcp.pop %v725
        %v727 = vmul.f32 %v707, %v726
        %v728 = vld [vmem:[#allocation5] sm:$0xf]
        %v729 = vld [vmem:[#allocation5 + $0x4] sm:$0xf]
        %v730 = vld [vmem:[#allocation5 + $0x8] sm:$0xf]
        %v731 = vld [vmem:[#allocation5 + $0xc] sm:$0xf]
        %v732 = vpack.c.bf16 %v727, %v727
        %v733 = vld [vmem:[%s5] sm:$0x1]
        %v735 = vlaneseq
        %v736 = vshrl.u32 %v735, 7
        %v737 = vsub.s32 0, %v736
        %v738 = vrot.slane %v733, %v737
        %v744 = vunpack.c.l.b16 %v728
        %v745 = vunpack.c.l.b16 %v729
        %v746 = vunpack.c.l.b16 %v730
        %v747 = vunpack.c.l.b16 %v731
        %v748 = vpack.c.b16 %v745, %v744
        %v749 = vpack.c.b16 %v747, %v746
        %v753 = vsel %vm697, %v732, 0
        %755 = vmatprep.subr.bf16.mxu0 0
        %756 = vmatpush1.bf16.msra.mxu0 0
        %757 = vmatprep.subr.bf16.mxu0 0
        %758 = vmatpush1.bf16.msra.mxu0 0
        %759 = vmatprep.subr.bf16.mxu0 0
        %760 = vmatpush1.bf16.msra.mxu0 0
        %761 = vmatprep.subr.bf16.mxu0 0
        %762 = vmatpush1.bf16.msra.mxu0 0
        %763 = vmatprep.subr.bf16.mxu0 0
        %764 = vmatpush1.bf16.msra.mxu0 0
        %765 = vmatprep.subr.bf16.mxu0 0
        %766 = vmatpush1.bf16.msra.mxu0 0
        %767 = vmatprep.subr.bf16.mxu0 0
        %768 = vmatpush1.bf16.msra.mxu0 %v749
        %769 = vmatprep.subr.bf16.mxu0 0
        %770 = vmatpush1.bf16.msra.mxu0 %v748
        %771 = vmatprep.subr.bf16.mxu0 0
        %772 = vmatpush2.bf16.msra.mxu0 0
        %773 = vmatprep.subr.bf16.mxu0 0
        %774 = vmatpush2.bf16.msra.mxu0 0
        %775 = vmatprep.subr.bf16.mxu0 0
        %776 = vmatpush2.bf16.msra.mxu0 0
        %777 = vmatprep.subr.bf16.mxu0 0
        %778 = vmatpush2.bf16.msra.mxu0 0
        %779 = vmatprep.subr.bf16.mxu0 0
        %780 = vmatpush2.bf16.msra.mxu0 0
        %781 = vmatprep.subr.bf16.mxu0 0
        %782 = vmatpush2.bf16.msra.mxu0 0
        %783 = vmatprep.subr.bf16.mxu0 0
        %784 = vmatpush2.bf16.msra.mxu0 0
        %785 = vmatprep.subr.bf16.mxu0 0
        %786 = vmatpush2.bf16.msra.mxu0 0
        %787 = vmatprep.mubr.bf16.mxu0 0
        %788 = vmatmul.mubr.bf16.gmra.mxu0 %v753
        %v789 = vpop.f32.mrf.mxu0
        %v790 = vadd.f32 %v738, %v789
        %v791 = vpop.f32.mrf.mxu0
        %v792 = vpop.f32.mrf.mxu0
        %v793 = vpop.f32.mrf.mxu0
        %794 = vdwg.mxu0
        %v795 = vld [vmem:[%s6] sm:$0x1]
        %v796 = vld [vmem:[%s7] sm:$0x1]
        %vm797 = vcmask 523264
        %v798 = vsel %vm797, %v790, 0.0
        %799 = vadd.xlane.f32.xlu0 %v798
        %v800 = vpop.xlane.xlu0 %799
        %v801 = vrcp.pop 64.0
        %v802 = vmul.f32 %v800, %v801
        %v803 = vsub.f32 %v790, %v802
        %v804 = vmul.f32 %v803, %v803
        %v805 = vsel %vm797, %v804, 0.0
        %806 = vadd.xlane.f32.xlu0 %v805
        %v807 = vpop.xlane.xlu0 %806
        %v808 = vmul.f32 %v807, %v801
        %v809 = vadd.f32 %v808, 1e-05
        %v810 = vrsqrt.pop %v809
        %v811 = vmul.f32 %v803, %v810
        %v813 = vlaneseq
        %v814 = vshrl.u32 %v813, 7
        %v815 = vsub.s32 0, %v814
        %v816 = vrot.slane %v795, %v815
        %v818 = vmul.f32 %v811, %v816
        %v820 = vlaneseq
        %v821 = vshrl.u32 %v820, 7
        %v822 = vsub.s32 0, %v821
        %v823 = vrot.slane %v796, %v822
        %v825 = vadd.f32 %v818, %v823
        %vm826 = vcmp.gt.f32.partialorder %v825, 0.0
        %v827 = vmul.f32 %v825, 0.2
        %v828 = vsel %vm826, %v825, %v827
        %v829 = vld [vmem:[%s8] sm:$0xf]
        %v830 = vld [vmem:[%s8 + $0x4] sm:$0xf]
        %v831 = vld [vmem:[%s8 + $0x8] sm:$0xf]
        %v832 = vld [vmem:[%s8 + $0xc] sm:$0xf]
        %v833 = vld [vmem:[%s8 + $0x10] sm:$0xf]
        %v834 = vld [vmem:[%s8 + $0x14] sm:$0xf]
        %v835 = vld [vmem:[%s8 + $0x18] sm:$0xf]
        %v836 = vld [vmem:[%s8 + $0x1c] sm:$0xf]
        %v837 = vpack.c.bf16 %v828, %v828
        %v838 = vld [vmem:[%s9] sm:$0x1]
        %v840 = vlaneseq
        %v841 = vshrl.u32 %v840, 7
        %v842 = vsub.s32 0, %v841
        %v843 = vrot.slane %v838, %v842
        %v853 = vunpack.c.l.b16 %v829
        %v854 = vunpack.c.l.b16 %v830
        %v855 = vunpack.c.l.b16 %v831
        %v856 = vunpack.c.l.b16 %v832
        %v857 = vunpack.c.l.b16 %v833
        %v858 = vunpack.c.l.b16 %v834
        %v859 = vunpack.c.l.b16 %v835
        %v860 = vunpack.c.l.b16 %v836
        %v861 = vpack.c.b16 %v854, %v853
        %v862 = vpack.c.b16 %v856, %v855
        %v863 = vpack.c.b16 %v858, %v857
        %v864 = vpack.c.b16 %v860, %v859
        %v870 = vsel %vm797, %v837, 0
        %872 = vmatprep.subr.bf16.mxu0 0
        %873 = vmatpush1.bf16.msra.mxu0 0
        %874 = vmatprep.subr.bf16.mxu0 0
        %875 = vmatpush1.bf16.msra.mxu0 0
        %876 = vmatprep.subr.bf16.mxu0 0
        %877 = vmatpush1.bf16.msra.mxu0 0
        %878 = vmatprep.subr.bf16.mxu0 0
        %879 = vmatpush1.bf16.msra.mxu0 0
        %880 = vmatprep.subr.bf16.mxu0 0
        %881 = vmatpush1.bf16.msra.mxu0 %v864
        %882 = vmatprep.subr.bf16.mxu0 0
        %883 = vmatpush1.bf16.msra.mxu0 %v863
        %884 = vmatprep.subr.bf16.mxu0 0
        %885 = vmatpush1.bf16.msra.mxu0 %v862
        %886 = vmatprep.subr.bf16.mxu0 0
        %887 = vmatpush1.bf16.msra.mxu0 %v861
        %888 = vmatprep.subr.bf16.mxu0 0
        %889 = vmatpush2.bf16.msra.mxu0 0
        %890 = vmatprep.subr.bf16.mxu0 0
        %891 = vmatpush2.bf16.msra.mxu0 0
        %892 = vmatprep.subr.bf16.mxu0 0
        %893 = vmatpush2.bf16.msra.mxu0 0
        %894 = vmatprep.subr.bf16.mxu0 0
        %895 = vmatpush2.bf16.msra.mxu0 0
        %896 = vmatprep.subr.bf16.mxu0 0
        %897 = vmatpush2.bf16.msra.mxu0 0
        %898 = vmatprep.subr.bf16.mxu0 0
        %899 = vmatpush2.bf16.msra.mxu0 0
        %900 = vmatprep.subr.bf16.mxu0 0
        %901 = vmatpush2.bf16.msra.mxu0 0
        %902 = vmatprep.subr.bf16.mxu0 0
        %903 = vmatpush2.bf16.msra.mxu0 0
        %904 = vmatprep.mubr.bf16.mxu0 0
        %905 = vmatmul.mubr.bf16.gmra.mxu0 %v870
        %v906 = vpop.f32.mrf.mxu0
        %v907 = vadd.f32 %v843, %v906
        %v908 = vpop.f32.mrf.mxu0
        %v909 = vpop.f32.mrf.mxu0
        %v910 = vpop.f32.mrf.mxu0
        %911 = vdwg.mxu0
        %v912 = vld [vmem:[%s10] sm:$0x1]
        %v913 = vld [vmem:[%s11] sm:$0x1]
        %v914 = vsel %vm797, %v907, 0.0
        %915 = vadd.xlane.f32.xlu0 %v914
        %v916 = vpop.xlane.xlu0 %915
        %v917 = vmul.f32 %v916, %v801
        %v918 = vsub.f32 %v907, %v917
        %v919 = vmul.f32 %v918, %v918
        %v920 = vsel %vm797, %v919, 0.0
        %921 = vadd.xlane.f32.xlu0 %v920
        %v922 = vpop.xlane.xlu0 %921
        %v923 = vmul.f32 %v922, %v801
        %v924 = vadd.f32 %v923, 1e-05
        %v925 = vrsqrt.pop %v924
        %v926 = vmul.f32 %v918, %v925
        %v928 = vlaneseq
        %v929 = vshrl.u32 %v928, 7
        %v930 = vsub.s32 0, %v929
        %v931 = vrot.slane %v912, %v930
        %v933 = vmul.f32 %v926, %v931
        %v935 = vlaneseq
        %v936 = vshrl.u32 %v935, 7
        %v937 = vsub.s32 0, %v936
        %v938 = vrot.slane %v913, %v937
        %v940 = vadd.f32 %v933, %v938
        %vm941 = vcmp.gt.f32.partialorder %v940, 0.0
        %v942 = vmul.f32 %v940, 0.2
        %v943 = vsel %vm941, %v940, %v942
        %v944 = vld [vmem:[%s12] sm:$0xf]
        %v945 = vld [vmem:[%s12 + $0x4] sm:$0xf]
        %v946 = vld [vmem:[%s12 + $0x8] sm:$0xf]
        %v947 = vld [vmem:[%s12 + $0xc] sm:$0xf]
        %v948 = vld [vmem:[%s12 + $0x10] sm:$0xf]
        %v949 = vld [vmem:[%s12 + $0x14] sm:$0xf]
        %v950 = vld [vmem:[%s12 + $0x18] sm:$0xf]
        %v951 = vld [vmem:[%s12 + $0x1c] sm:$0xf]
        %v952 = vpack.c.bf16 %v943, %v943
        %v953 = vld [vmem:[%s13] sm:$0x1]
        %v955 = vlaneseq
        %v956 = vshrl.u32 %v955, 7
        %v957 = vsub.s32 0, %v956
        %v958 = vrot.slane %v953, %v957
        %v968 = vunpack.c.l.b16 %v944
        %v969 = vunpack.c.l.b16 %v945
        %v970 = vunpack.c.l.b16 %v946
        %v971 = vunpack.c.l.b16 %v947
        %v972 = vunpack.c.l.b16 %v948
        %v973 = vunpack.c.l.b16 %v949
        %v974 = vunpack.c.l.b16 %v950
        %v975 = vunpack.c.l.b16 %v951
        %v976 = vpack.c.b16 %v969, %v968
        %v977 = vpack.c.b16 %v971, %v970
        %v978 = vpack.c.b16 %v973, %v972
        %v979 = vpack.c.b16 %v975, %v974
        %v985 = vsel %vm797, %v952, 0
        %987 = vmatprep.subr.bf16.mxu0 0
        %988 = vmatpush1.bf16.msra.mxu0 0
        %989 = vmatprep.subr.bf16.mxu0 0
        %990 = vmatpush1.bf16.msra.mxu0 0
        %991 = vmatprep.subr.bf16.mxu0 0
        %992 = vmatpush1.bf16.msra.mxu0 0
        %993 = vmatprep.subr.bf16.mxu0 0
        %994 = vmatpush1.bf16.msra.mxu0 0
        %995 = vmatprep.subr.bf16.mxu0 0
        %996 = vmatpush1.bf16.msra.mxu0 %v979
        %997 = vmatprep.subr.bf16.mxu0 0
        %998 = vmatpush1.bf16.msra.mxu0 %v978
        %999 = vmatprep.subr.bf16.mxu0 0
        %1000 = vmatpush1.bf16.msra.mxu0 %v977
        %1001 = vmatprep.subr.bf16.mxu0 0
        %1002 = vmatpush1.bf16.msra.mxu0 %v976
        %1003 = vmatprep.subr.bf16.mxu0 0
        %1004 = vmatpush2.bf16.msra.mxu0 0
        %1005 = vmatprep.subr.bf16.mxu0 0
        %1006 = vmatpush2.bf16.msra.mxu0 0
        %1007 = vmatprep.subr.bf16.mxu0 0
        %1008 = vmatpush2.bf16.msra.mxu0 0
        %1009 = vmatprep.subr.bf16.mxu0 0
        %1010 = vmatpush2.bf16.msra.mxu0 0
        %1011 = vmatprep.subr.bf16.mxu0 0
        %1012 = vmatpush2.bf16.msra.mxu0 0
        %1013 = vmatprep.subr.bf16.mxu0 0
        %1014 = vmatpush2.bf16.msra.mxu0 0
        %1015 = vmatprep.subr.bf16.mxu0 0
        %1016 = vmatpush2.bf16.msra.mxu0 0
        %1017 = vmatprep.subr.bf16.mxu0 0
        %1018 = vmatpush2.bf16.msra.mxu0 0
        %1019 = vmatprep.mubr.bf16.mxu0 0
        %1020 = vmatmul.mubr.bf16.gmra.mxu0 %v985
        %v1021 = vpop.f32.mrf.mxu0
        %v1022 = vadd.f32 %v958, %v1021
        %v1023 = vpop.f32.mrf.mxu0
        %v1024 = vpop.f32.mrf.mxu0
        %v1025 = vpop.f32.mrf.mxu0
        %1026 = vdwg.mxu0
        %v1027 = vld [vmem:[%s14] sm:$0x1]
        %v1028 = vld [vmem:[%s15] sm:$0x1]
        %v1029 = vsel %vm797, %v1022, 0.0
        %1030 = vadd.xlane.f32.xlu0 %v1029
        %v1031 = vpop.xlane.xlu0 %1030
        %v1032 = vmul.f32 %v1031, %v801
        %v1033 = vsub.f32 %v1022, %v1032
        %v1034 = vmul.f32 %v1033, %v1033
        %v1035 = vsel %vm797, %v1034, 0.0
        %1036 = vadd.xlane.f32.xlu0 %v1035
        %v1037 = vpop.xlane.xlu0 %1036
        %v1038 = vmul.f32 %v1037, %v801
        %v1039 = vadd.f32 %v1038, 1e-05
        %v1040 = vrsqrt.pop %v1039
        %v1041 = vmul.f32 %v1033, %v1040
        %v1043 = vlaneseq
        %v1044 = vshrl.u32 %v1043, 7
        %v1045 = vsub.s32 0, %v1044
        %v1046 = vrot.slane %v1027, %v1045
        %v1048 = vmul.f32 %v1041, %v1046
        %v1050 = vlaneseq
        %v1051 = vshrl.u32 %v1050, 7
        %v1052 = vsub.s32 0, %v1051
        %v1053 = vrot.slane %v1028, %v1052
        %v1055 = vadd.f32 %v1048, %v1053
        %vm1056 = vcmp.gt.f32.partialorder %v1055, 0.0
        %v1057 = vmul.f32 %v1055, 0.2
        %v1058 = vsel %vm1056, %v1055, %v1057
        %v1059 = vld [vmem:[%s16] sm:$0xf]
        %v1060 = vld [vmem:[%s16 + $0x4] sm:$0xf]
        %v1061 = vld [vmem:[%s16 + $0x8] sm:$0xf]
        %v1062 = vld [vmem:[%s16 + $0xc] sm:$0xf]
        %v1063 = vld [vmem:[%s16 + $0x10] sm:$0xf]
        %v1064 = vld [vmem:[%s16 + $0x14] sm:$0xf]
        %v1065 = vld [vmem:[%s16 + $0x18] sm:$0xf]
        %v1066 = vld [vmem:[%s16 + $0x1c] sm:$0xf]
        %v1067 = vpack.c.bf16 %v1058, %v1058
        %v1068 = vld [vmem:[%s17] sm:$0x1]
        %v1070 = vlaneseq
        %v1071 = vshrl.u32 %v1070, 7
        %v1072 = vsub.s32 0, %v1071
        %v1073 = vrot.slane %v1068, %v1072
        %v1083 = vunpack.c.l.b16 %v1059
        %v1084 = vunpack.c.l.b16 %v1060
        %v1085 = vunpack.c.l.b16 %v1061
        %v1086 = vunpack.c.l.b16 %v1062
        %v1087 = vunpack.c.l.b16 %v1063
        %v1088 = vunpack.c.l.b16 %v1064
        %v1089 = vunpack.c.l.b16 %v1065
        %v1090 = vunpack.c.l.b16 %v1066
        %v1091 = vpack.c.b16 %v1084, %v1083
        %v1092 = vpack.c.b16 %v1086, %v1085
        %v1093 = vpack.c.b16 %v1088, %v1087
        %v1094 = vpack.c.b16 %v1090, %v1089
        %v1100 = vsel %vm797, %v1067, 0
        %1102 = vmatprep.subr.bf16.mxu0 0
        %1103 = vmatpush1.bf16.msra.mxu0 0
        %1104 = vmatprep.subr.bf16.mxu0 0
        %1105 = vmatpush1.bf16.msra.mxu0 0
        %1106 = vmatprep.subr.bf16.mxu0 0
        %1107 = vmatpush1.bf16.msra.mxu0 0
        %1108 = vmatprep.subr.bf16.mxu0 0
        %1109 = vmatpush1.bf16.msra.mxu0 0
        %1110 = vmatprep.subr.bf16.mxu0 0
        %1111 = vmatpush1.bf16.msra.mxu0 %v1094
        %1112 = vmatprep.subr.bf16.mxu0 0
        %1113 = vmatpush1.bf16.msra.mxu0 %v1093
        %1114 = vmatprep.subr.bf16.mxu0 0
        %1115 = vmatpush1.bf16.msra.mxu0 %v1092
        %1116 = vmatprep.subr.bf16.mxu0 0
        %1117 = vmatpush1.bf16.msra.mxu0 %v1091
        %1118 = vmatprep.subr.bf16.mxu0 0
        %1119 = vmatpush2.bf16.msra.mxu0 0
        %1120 = vmatprep.subr.bf16.mxu0 0
        %1121 = vmatpush2.bf16.msra.mxu0 0
        %1122 = vmatprep.subr.bf16.mxu0 0
        %1123 = vmatpush2.bf16.msra.mxu0 0
        %1124 = vmatprep.subr.bf16.mxu0 0
        %1125 = vmatpush2.bf16.msra.mxu0 0
        %1126 = vmatprep.subr.bf16.mxu0 0
        %1127 = vmatpush2.bf16.msra.mxu0 0
        %1128 = vmatprep.subr.bf16.mxu0 0
        %1129 = vmatpush2.bf16.msra.mxu0 0
        %1130 = vmatprep.subr.bf16.mxu0 0
        %1131 = vmatpush2.bf16.msra.mxu0 0
        %1132 = vmatprep.subr.bf16.mxu0 0
        %1133 = vmatpush2.bf16.msra.mxu0 0
        %1134 = vmatprep.mubr.bf16.mxu0 0
        %1135 = vmatmul.mubr.bf16.gmra.mxu0 %v1100
        %v1136 = vpop.f32.mrf.mxu0
        %v1137 = vadd.f32 %v1073, %v1136
        %v1138 = vpop.f32.mrf.mxu0
        %v1139 = vpop.f32.mrf.mxu0
        %v1140 = vpop.f32.mrf.mxu0
        %1141 = vdwg.mxu0
        %v1142 = vpack.c.bf16 %v1137, %v1137
        %v1143 = vld [vmem:[%s690] sm:$0xf]
        %v1144 = vld [vmem:[%s690 + $0x4] sm:$0xf]
        %v1145 = vld [vmem:[%s606] sm:$0x1]
        %v1146 = vmul.f32 %v1145, 2.0
        %v1148 = vlaneseq
        %v1149 = vshrl.u32 %v1148, 7
        %v1150 = vsub.s32 0, %v1149
        %v1151 = vrot.slane %v1146, %v1150
        %v1155 = vunpack.c.l.b16 %v1143
        %v1156 = vunpack.c.l.b16 %v1144
        %v1157 = vpack.c.b16 %v1156, %v1155
        %vm1159 = vcmask 130048
        %v1161 = vsel %vm1159, %v1142, 0
        %1163 = vmatprep.subr.bf16.mxu0 0
        %1164 = vmatpush1.bf16.msra.mxu0 0
        %1165 = vmatprep.subr.bf16.mxu0 0
        %1166 = vmatpush1.bf16.msra.mxu0 0
        %1167 = vmatprep.subr.bf16.mxu0 0
        %1168 = vmatpush1.bf16.msra.mxu0 0
        %1169 = vmatprep.subr.bf16.mxu0 0
        %1170 = vmatpush1.bf16.msra.mxu0 0
        %1171 = vmatprep.subr.bf16.mxu0 0
        %1172 = vmatpush1.bf16.msra.mxu0 0
        %1173 = vmatprep.subr.bf16.mxu0 0
        %1174 = vmatpush1.bf16.msra.mxu0 0
        %1175 = vmatprep.subr.bf16.mxu0 0
        %1176 = vmatpush1.bf16.msra.mxu0 0
        %1177 = vmatprep.subr.bf16.mxu0 0
        %1178 = vmatpush1.bf16.msra.mxu0 %v1157
        %1179 = vmatprep.subr.bf16.mxu0 0
        %1180 = vmatpush2.bf16.msra.mxu0 0
        %1181 = vmatprep.subr.bf16.mxu0 0
        %1182 = vmatpush2.bf16.msra.mxu0 0
        %1183 = vmatprep.subr.bf16.mxu0 0
        %1184 = vmatpush2.bf16.msra.mxu0 0
        %1185 = vmatprep.subr.bf16.mxu0 0
        %1186 = vmatpush2.bf16.msra.mxu0 0
        %1187 = vmatprep.subr.bf16.mxu0 0
        %1188 = vmatpush2.bf16.msra.mxu0 0
        %1189 = vmatprep.subr.bf16.mxu0 0
        %1190 = vmatpush2.bf16.msra.mxu0 0
        %1191 = vmatprep.subr.bf16.mxu0 0
        %1192 = vmatpush2.bf16.msra.mxu0 0
        %1193 = vmatprep.subr.bf16.mxu0 0
        %1194 = vmatpush2.bf16.msra.mxu0 0
        %1195 = vmatprep.mubr.bf16.mxu0 0
        %1196 = vmatmul.mubr.bf16.gmra.mxu0 %v1161
        %v1197 = vpop.f32.mrf.mxu0
        %v1198 = vadd.f32 %v1151, %v1197
        %v1199 = vpop.f32.mrf.mxu0
        %v1200 = vpop.f32.mrf.mxu0
        %v1201 = vpop.f32.mrf.mxu0
        %1202 = vdwg.mxu0
        %v1203 = vld [vmem:[%s694] sm:$0xff]
        %1205 = vset.pattern.permute.xlu0 0
        %1206 = vperm.xlu0 %1205, %v1203
        %v1207 = vpop.permute.xlu0 %1206
        %v1209 = vadd.f32 %v1198, %v1207
        %vm1210 = vcmask 64512
        %v1211 = vsel %vm1210, %v1209, -inf
        %1212 = vmax.xlane.f32.xlu0 %v1211
        %v1213 = vpop.xlane.xlu0 %1212
        %v1214 = vrot.slane %v1213, 4
        %v1215 = vmax.f32 %v1213, %v1214
        %v1216 = vrot.slane %v1215, 2
        %v1217 = vmax.f32 %v1215, %v1216
        %v1218 = vrot.slane %v1217, 1
        %v1219 = vmax.f32 %v1217, %v1218
        %v1220 = vsub.f32 %v1209, %v1219
        %v1221 = vmul.f32 %v1220, 20.0
        %v1222 = vmul.f32 %v1221, 1.442695
        %v1223 = vpow.pop %v1222
        %v1224 = vsel %vm1210, %v1223, 0.0
        %1225 = vadd.xlane.f32.xlu0 %v1224
        %v1226 = vpop.xlane.xlu0 %1225
        %v1227 = vmul.f32 %v1223, %v1223
        %v1228 = vsel %vm1210, %v1227, 0.0
        %1229 = vadd.xlane.f32.xlu0 %v1228
        %v1230 = vpop.xlane.xlu0 %1229
        %v1231 = vadd.f32 %v1226, 1e-06
        %v1232 = vrcp.pop %v1231
        %v1233 = vmul.f32 1.0, %v1232
        %v1234 = vmul.f32 %v1233, %v1233
        %v1235 = vmul.f32 %v1234, %v1230
        %v1236 = vadd.f32 %v1235, 1e-08
        %v1237 = vrsqrt.pop %v1236
        %v1238 = vmul.f32 %v1236, %v1237
        %vm1239 = vcmp.eq.f32.partialorder %v1236, inf
        %v1240 = vsel %vm1239, %v1236, %v1238
        %vm1241 = vcmp.eq.f32.partialorder %v1236, 0.0
        %v1242 = vand.u32 %v1236, 2147483648
        %v1243 = vsel %vm1241, %v1242, %v1240
        %v1244 = vadd.f32 %v1243, 1e-06
        %v1245 = vrcp.pop %v1244
        %v1246 = vmul.f32 1.0, %v1245
        %v1247 = vmul.f32 %v1233, %v1246
        %v1248 = vmul.f32 %v1223, %v1247
        %v1249 = vpack.c.bf16 %v1248, %v1248
        %vm1250 = vcmask 60416
        %1251 = vst.msk [vmem:[%s681] sm:$0xf] %vm1250, %v1249
        %v1252 = vsel %vm1210, %v1248, 0.0
        %v1253 = vrot.slane %v1252, 4
        %v1254 = vadd.f32 %v1252, %v1253
        %v1255 = vrot.slane %v1254, 2
        %v1256 = vadd.f32 %v1254, %v1255
        %v1257 = vrot.slane %v1256, 1
        %v1258 = vadd.f32 %v1256, %v1257
        %v1259 = vadd.f32 %v1258, 1e-06
        %v1260 = vrcp.pop %v1259
        %v1261 = vmul.f32 1.0, %v1260
        %v1262 = vmul.f32 %v1248, %v1261
        %1263 = vxpose.xlu0.b32.start [1/16] %v1262, 128
        %1264 = vxpose.xlu0.b32.cont [2/16] 0.0, 128
        %1265 = vxpose.xlu0.b32.cont [3/16] 0.0, 128
        %1266 = vxpose.xlu0.b32.cont [4/16] 0.0, 128
        %1267 = vxpose.xlu0.b32.cont [5/16] 0.0, 128
        %1268 = vxpose.xlu0.b32.cont [6/16] 0.0, 128
        %1269 = vxpose.xlu0.b32.cont [7/16] 0.0, 128
        %1270 = vxpose.xlu0.b32.cont [8/16] 0.0, 128
        %1271 = vxpose.xlu0.b32.cont [9/16] 0.0, 128
        %1272 = vxpose.xlu0.b32.cont [10/16] 0.0, 128
        %1273 = vxpose.xlu0.b32.cont [11/16] 0.0, 128
        %1274 = vxpose.xlu0.b32.cont [12/16] 0.0, 128
        %1275 = vxpose.xlu0.b32.cont [13/16] 0.0, 128
        %1276 = vxpose.xlu0.b32.cont [14/16] 0.0, 128
        %1277 = vxpose.xlu0.b32.cont [15/16] 0.0, 128
        %1278 = vxpose.xlu0.b32.end [16/16] 0.0, 128
        %v1279 = vpop.trf.xlu0
        %v1280 = vpop.trf.xlu0
        %v1281 = vpop.trf.xlu0
        %v1282 = vpop.trf.xlu0
        %v1283 = vpop.trf.xlu0
        %v1284 = vpop.trf.xlu0
        %v1285 = vpop.trf.xlu0
        %v1286 = vpop.trf.xlu0
        %v1287 = vpop.trf.xlu0
        %v1288 = vpop.trf.xlu0
        %v1289 = vpop.trf.xlu0
        %v1290 = vpop.trf.xlu0
        %v1291 = vpop.trf.xlu0
        %v1292 = vpop.trf.xlu0
        %v1293 = vpop.trf.xlu0
        %v1294 = vpop.trf.xlu0
        %v1295 = vpack.c.bf16 %v1279, %v1279
        %v1296 = vpack.c.bf16 %v696, %v696
        %v1298 = vsel %vm1210, %v1295, 0
        %vm1300 = vcmask 1043456
        %v1302 = vsel %vm1300, %v1296, 0
        %1304 = vmatprep.subr.bf16.mxu0 0
        %1305 = vmatpush1.bf16.msra.mxu0 0
        %1306 = vmatprep.subr.bf16.mxu0 0
        %1307 = vmatpush1.bf16.msra.mxu0 0
        %1308 = vmatprep.subr.bf16.mxu0 0
        %1309 = vmatpush1.bf16.msra.mxu0 0
        %1310 = vmatprep.subr.bf16.mxu0 0
        %1311 = vmatpush1.bf16.msra.mxu0 0
        %1312 = vmatprep.subr.bf16.mxu0 0
        %1313 = vmatpush1.bf16.msra.mxu0 0
        %1314 = vmatprep.subr.bf16.mxu0 0
        %1315 = vmatpush1.bf16.msra.mxu0 0
        %1316 = vmatprep.subr.bf16.mxu0 0
        %1317 = vmatpush1.bf16.msra.mxu0 0
        %1318 = vmatprep.subr.bf16.mxu0 0
        %1319 = vmatpush1.bf16.msra.mxu0 %v1302
        %1320 = vmatprep.subr.bf16.mxu0 0
        %1321 = vmatpush2.bf16.msra.mxu0 0
        %1322 = vmatprep.subr.bf16.mxu0 0
        %1323 = vmatpush2.bf16.msra.mxu0 0
        %1324 = vmatprep.subr.bf16.mxu0 0
        %1325 = vmatpush2.bf16.msra.mxu0 0
        %1326 = vmatprep.subr.bf16.mxu0 0
        %1327 = vmatpush2.bf16.msra.mxu0 0
        %1328 = vmatprep.subr.bf16.mxu0 0
        %1329 = vmatpush2.bf16.msra.mxu0 0
        %1330 = vmatprep.subr.bf16.mxu0 0
        %1331 = vmatpush2.bf16.msra.mxu0 0
        %1332 = vmatprep.subr.bf16.mxu0 0
        %1333 = vmatpush2.bf16.msra.mxu0 0
        %1334 = vmatprep.subr.bf16.mxu0 0
        %1335 = vmatpush2.bf16.msra.mxu0 0
        %1336 = vmatprep.mubr.bf16.mxu0 0
        %1337 = vmatmul.mubr.bf16.gmra.mxu0 %v1298
        %v1338 = vpop.f32.mrf.mxu0
        %v1339 = vadd.f32 0.0, %v1338
        %v1340 = vpop.f32.mrf.mxu0
        %v1341 = vpop.f32.mrf.mxu0
        %v1342 = vpop.f32.mrf.mxu0
        %1343 = vdwg.mxu0
        %1344 = vst.msk [vmem:[%s674] sm:$0xff] %vm697, %v1339
        %s1345 = sand.u32 %s447, 1
        %s1346 = scalar_lea.sflag [#allocation4], %s1345
        %s1347 = sand.u32 %s447, 1
        %s1348 = smul.addr %s1347, 8
        %s1349 = scalar_lea.vmem [#allocation7], %s1348
        %s1350 = sand.u32 %s473, 1
        %s1351 = scalar_lea.sflag [#allocation9], %s1350
        %s1352 = sand.u32 %s473, 1
        %s1353 = smul.addr %s1352, 4
        %s1354 = scalar_lea.vmem [#allocation8], %s1353
        // Predicated region
        $region101: #{tpu_custom_call.1} parent=91 // pred_check
          %p1355 = pneg %p457
        $region102: #{tpu_custom_call.1} parent=91 // pred_check_branch
          %1357 = sbr.rel (%p1355) target = $region104
        $region103: #{tpu_custom_call.1} parent=91 // pred_region
          %s1359 = ssub.s32 128, 128
          %1360 = vsyncadd %s1346, %s1359
          %s1361 = smul.addr %s41, 128
          %s1362 = scalar_lea.hbm %s18, %s1361
          %s1364 = sshll.u32 %s1349, 4
          %s1365 = int_to_ptr.vmem [resolvable:$true] %s1364
          %1367 = dma.vmem_to_hbm [thread:$0]  %s1365, 128, %s1362, %s1346
        $region104: #{tpu_custom_call.1} parent=91 // pred_fallthru
          _
        // Predicated region
        $region105: #{tpu_custom_call.1} parent=91 // pred_check
          %p1368 = pneg %p483
        $region106: #{tpu_custom_call.1} parent=91 // pred_check_branch
          %1370 = sbr.rel (%p1368) target = $region108
        $region107: #{tpu_custom_call.1} parent=91 // pred_region
          %s1372 = ssub.s32 64, 64
          %1373 = vsyncadd %s1351, %s1372
          %s1374 = smul.addr %s41, 64
          %s1375 = scalar_lea.hbm %s19, %s1374
          %s1377 = sshll.u32 %s1354, 4
          %s1378 = int_to_ptr.vmem [resolvable:$true] %s1377
          %1380 = dma.vmem_to_hbm [thread:$0]  %s1378, 64, %s1375, %s1351
        $region108: #{tpu_custom_call.1} parent=91 // pred_fallthru
          _
      $region92: #{tpu_custom_call.1} parent=5 // pred_fallthru
        _
      %p1381 = scmp.le.s32.totalorder 2, %s36
      // Predicated region
      $region109: #{tpu_custom_call.1} parent=5 // pred_check
        %p1382 = pneg %p1381
      $region110: #{tpu_custom_call.1} parent=5 // pred_check_branch
        %1384 = sbr.rel (%p1382) target = $region112
      $region111: #{tpu_custom_call.1} parent=5 // pred_region
        %s1385 = ssub.s32 %s36, 2
        // Predicated region
        $region113: #{tpu_custom_call.1} parent=111 // pred_check
          %p1386 = pneg %p463
        $region114: #{tpu_custom_call.1} parent=111 // pred_check_branch
          %1388 = sbr.rel (%p1386) target = $region116
        $region115: #{tpu_custom_call.1} parent=111 // pred_region
          %s1389 = sand.u32 %s448, 1
          %s1390 = scalar_lea.sflag [#allocation4], %s1389
          %s1391 = sand.u32 %s448, 1
          %s1392 = smul.addr %s1391, 8
          %s1393 = scalar_lea.vmem [#allocation7], %s1392
          %1394 = dma.done %s1390, 128
        $region116: #{tpu_custom_call.1} parent=111 // pred_fallthru
          _
        // Predicated region
        $region117: #{tpu_custom_call.1} parent=111 // pred_check
          %p1395 = pneg %p489
        $region118: #{tpu_custom_call.1} parent=111 // pred_check_branch
          %1397 = sbr.rel (%p1395) target = $region120
        $region119: #{tpu_custom_call.1} parent=111 // pred_region
          %s1398 = sand.u32 %s474, 1
          %s1399 = scalar_lea.sflag [#allocation9], %s1398
          %s1400 = sand.u32 %s474, 1
          %s1401 = smul.addr %s1400, 4
          %s1402 = scalar_lea.vmem [#allocation8], %s1401
          %1403 = dma.done %s1399, 64
        $region120: #{tpu_custom_call.1} parent=111 // pred_fallthru
          _
      $region112: #{tpu_custom_call.1} parent=5 // pred_fallthru
        _
    $region6: #{tpu_custom_call.1} parent=1 // loop_footer
      %s40 = sadd.s32 1, %s36
    $region7: #{tpu_custom_call.1} parent=1 // loop_footer_branch
      %35 = sbr.rel target = $region3
    $region8: #{tpu_custom_call.1} parent=1 // loop_exit
      _
    %1404 = vsyncpa [#allocation3], 1
    %s1405 = scalar_lea.sflag [#allocation3], 1
    %1406 = vsyncpa %s1405, 1
    %1407 = vsyncpa [#allocation6], 1
    %1408 = vsyncpa [#allocation4], 1
    %s1409 = scalar_lea.sflag [#allocation4], 1
    %1410 = vsyncpa %s1409, 1
    %1411 = vsyncpa [#allocation9], 1
    %s1412 = scalar_lea.sflag [#allocation9], 1
    %1413 = vsyncpa %s1412, 1

</llo_original>
